<compile_context>
chip_gen: v5e
topology: v5e:2x2
jax: 0.10.0
libtpu: 0.0.40
codegen_flags: <defaults>
</compile_context>

<pallas_src>
import jax
import jax.numpy as jnp
from jax.experimental import pallas as pl
from jax.experimental.pallas import tpu as pltpu


def _round_up(x, m):
    return (x + m - 1) // m * m


def depthwise_separable_conv(x, depth_w, depth_b, point_w, point_b,
                             *, kernel_size=3, dilation=1, stride=1,
                             out_dtype=jnp.float32):
    """Fused depthwise(KxK, groups=C_in) + pointwise(1x1) conv.

    x:        (B, C_in, H, W)      NCHW, like the PyTorch module
    depth_w:  (C_in, 1, K, K)      torch depthwise Conv2d weight
    depth_b:  (C_in,)              torch depthwise Conv2d bias
    point_w:  (C_out, C_in, 1, 1)  torch pointwise Conv2d weight
    point_b:  (C_out,)             torch pointwise Conv2d bias
    returns:  (B, C_out, H_out, W_out) NCHW, `out_dtype`
    """
    B, Cin, H, W = x.shape
    K = kernel_size
    Cout = point_w.shape[0]
    assert stride == 1, "TODO(synk): only the module's default stride=1 is fused"
    pad = (stride - 1 + dilation * (K - 1)) // 2
    H_out = H + 2 * pad - dilation * (K - 1)
    W_out = W + 2 * pad - dilation * (K - 1)

    LANES, SUBLANES = 128, 8
    Cin_p = _round_up(Cin, LANES)        # lane / MXU-K fill
    Cout_p = _round_up(Cout, LANES)      # lane-dense output stores
    Hp = H + 2 * pad
    Wp = W + 2 * pad
    Wp_p = _round_up(Wp, SUBLANES)       # sublane-aligned padded width (roll-friendly)
    HW = H_out * W_out
    HWp = H_out * Wp_p                   # flattened (h, padded-w) rows

    # ---- wrapper-side layout glue (one pass over x; see note in header) ----
    x_nhwc = jnp.transpose(x, (0, 2, 3, 1))                     # (B, H, W, Cin)
    x_pad = jnp.pad(x_nhwc, ((0, 0), (pad, pad),
                             (pad, Wp_p - W - pad), (0, Cin_p - Cin)))
    x_pad = x_pad.astype(jnp.bfloat16)                          # (B, Hp, Wp_p, Cin_p)

    # depthwise weight -> tap-major (K*K, Cin_p), channels on lanes, f32
    wd_tap = jnp.transpose(depth_w[:, 0, :, :], (1, 2, 0)).reshape(K * K, Cin)
    wd_tap = jnp.pad(wd_tap, ((0, 0), (0, Cin_p - Cin))).astype(jnp.float32)
    bd2 = jnp.pad(depth_b.reshape(1, Cin),
                  ((0, 0), (0, Cin_p - Cin))).astype(jnp.float32)
    # pointwise weight -> (Cin_p, Cout_p) bf16 (zero rows/cols for padding)
    wp2 = jnp.transpose(point_w[:, :, 0, 0])
    wp2 = jnp.pad(wp2, ((0, Cin_p - Cin), (0, Cout_p - Cout))).astype(jnp.bfloat16)
    bp2 = jnp.pad(point_b.reshape(1, Cout),
                  ((0, 0), (0, Cout_p - Cout))).astype(jnp.float32)

    def kernel(x_ref, wd_ref, bd_ref, wp_ref, bp_ref, o_ref):
        # x_ref:  (Hp, Wp_p, Cin_p) bf16   padded input image (one per grid step)
        # wd_ref: (K*K, Cin_p)      f32    depthwise taps
        # bd_ref: (1, Cin_p)        f32
        # wp_ref: (Cin_p, Cout_p)   bf16   pointwise weight
        # bp_ref: (1, Cout_p)       f32
        # o_ref:  (HW, Cout_p)             lane-dense 2D output slab
        wd = wd_ref[...]                                  # hoisted weight load

        # depthwise conv: per-kw partial sums (kh shifts = free leading-dim
        # slices), then one XLU roll per kw to apply the width shift.
        acc = jnp.zeros((HWp, Cin_p), jnp.float32)
        for kw in range(K):
            part = jnp.zeros((H_out, Wp_p, Cin_p), jnp.float32)
            for kh in range(K):
                tap = x_ref[kh * dilation: kh * dilation + H_out]   # bf16
                w_row = wd[kh * K + kw: kh * K + kw + 1, :]          # (1, Cin_p) f32
                part = part + tap * w_row                            # promote -> f32
            part = part.reshape(HWp, Cin_p)
            if kw:
                part = pltpu.roll(part, shift=HWp - kw * dilation, axis=0)
            acc = acc + part
        acc = acc + bd_ref[...]                            # depthwise bias

        # trim padded width once, then one lane-dense MXU matmul over H*W rows
        acc = acc.reshape(H_out, Wp_p, Cin_p)[:, :W_out, :].reshape(HW, Cin_p)
        y = jnp.dot(acc.astype(jnp.bfloat16), wp_ref[...],
                    preferred_element_type=jnp.float32)
        y = y + bp_ref[...]                                # pointwise bias
        o_ref[...] = y.astype(o_ref.dtype)

    out2d = pl.pallas_call(
        kernel,
        out_shape=jax.ShapeDtypeStruct((B, HW, Cout_p), out_dtype),
        grid=(B,),
        in_specs=[
            pl.BlockSpec((None, Hp, Wp_p, Cin_p), lambda b: (b, 0, 0, 0)),
            pl.BlockSpec((K * K, Cin_p), lambda b: (0, 0)),
            pl.BlockSpec((1, Cin_p), lambda b: (0, 0)),
            pl.BlockSpec((Cin_p, Cout_p), lambda b: (0, 0)),
            pl.BlockSpec((1, Cout_p), lambda b: (0, 0)),
        ],
        out_specs=pl.BlockSpec((None, HW, Cout_p), lambda b: (b, 0, 0)),
        compiler_params=pltpu.CompilerParams(
            dimension_semantics=("parallel",),       # feeds both TCs on v7x
            vmem_limit_bytes=32 * 1024 * 1024),
    )(x_pad, wd_tap, bd2, wp2, bp2)

    # un-pad / un-flatten / NCHW (wrapper-side XLA glue)
    out = out2d[:, :, :Cout].reshape(B, H_out, W_out, Cout)
    return jnp.transpose(out, (0, 3, 1, 2))


def _reference(x, depth_w, depth_b, point_w, point_b,
               *, kernel_size=3, dilation=1, stride=1):
    """Pure-JAX (f32) reference mirroring the PyTorch forward."""
    K = kernel_size
    Cin = x.shape[1]
    pad = (stride - 1 + dilation * (K - 1)) // 2
    y = jax.lax.conv_general_dilated(
        x, depth_w, window_strides=(stride, stride),
        padding=[(pad, pad), (pad, pad)],
        rhs_dilation=(dilation, dilation),
        feature_group_count=Cin,
        dimension_numbers=("NCHW", "OIHW", "NCHW"))
    y = y + depth_b[None, :, None, None]
    z = jax.lax.conv_general_dilated(
        y, point_w, window_strides=(1, 1), padding=[(0, 0), (0, 0)],
        dimension_numbers=("NCHW", "OIHW", "NCHW"))
    z = z + point_b[None, :, None, None]
    return z


if __name__ == "__main__":
    B, Cin, Cout, H, W = 2, 32, 64, 16, 16
    key = jax.random.PRNGKey(0)
    kx, kdw, kdb, kpw, kpb = jax.random.split(key, 5)

    x = jax.random.normal(kx, (B, Cin, H, W), dtype=jnp.float32)
    depth_w = 0.1 * jax.random.normal(kdw, (Cin, 1, 3, 3), dtype=jnp.float32)
    depth_b = 0.1 * jax.random.normal(kdb, (Cin,), dtype=jnp.float32)
    point_w = 0.1 * jax.random.normal(kpw, (Cout, Cin, 1, 1), dtype=jnp.float32)
    point_b = 0.1 * jax.random.normal(kpb, (Cout,), dtype=jnp.float32)

    # dilation=1 (module default)
    out = jax.block_until_ready(
        depthwise_separable_conv(x, depth_w, depth_b, point_w, point_b))
    ref = _reference(x, depth_w, depth_b, point_w, point_b)
    assert out.shape == (B, Cout, H, W), out.shape
    err = float(jnp.max(jnp.abs(out - ref)))
    assert jnp.allclose(out, ref, atol=2e-2, rtol=2e-2), \
        f"dilation=1 mismatch vs reference, max abs err={err}"

    # dilation=2 (review: do not leave this path silently untested)
    out_d2 = jax.block_until_ready(
        depthwise_separable_conv(x, depth_w, depth_b, point_w, point_b, dilation=2))
    ref_d2 = _reference(x, depth_w, depth_b, point_w, point_b, dilation=2)
    err2 = float(jnp.max(jnp.abs(out_d2 - ref_d2)))
    assert jnp.allclose(out_d2, ref_d2, atol=2e-2, rtol=2e-2), \
        f"dilation=2 mismatch vs reference, max abs err={err2}"

    print("KERNEL_OK")
</pallas_src>

<mosaic_0001>
module attributes {stable_mosaic.version = 11 : i64} {
  func.func @kernel(%arg0: i32, %arg1: memref<1x18x24x128xbf16, #tpu.memory_space<vmem>>, %arg2: memref<9x128xf32, #tpu.memory_space<vmem>>, %arg3: memref<1x128xf32, #tpu.memory_space<vmem>>, %arg4: memref<128x128xbf16, #tpu.memory_space<vmem>>, %arg5: memref<1x128xf32, #tpu.memory_space<vmem>>, %arg6: memref<1x256x128xf32, #tpu.memory_space<vmem>>) attributes {dimension_semantics = [#tpu.dimension_semantics<parallel>], iteration_bounds = array<i64: 2>, scalar_prefetch = 0 : i64, scratch_operands = 0 : i64, tpu.core_type = #tpu.core_type<tc>, window_params = [{transform_indices = @transform_0, window_bounds = array<i64: 1, 18, 24, 128>}, {pipeline_mode = #tpu.pipeline_mode<synchronous>, transform_indices = @transform_1, window_bounds = array<i64: 9, 128>}, {pipeline_mode = #tpu.pipeline_mode<synchronous>, transform_indices = @transform_2, window_bounds = array<i64: 1, 128>}, {pipeline_mode = #tpu.pipeline_mode<synchronous>, transform_indices = @transform_3, window_bounds = array<i64: 128, 128>}, {pipeline_mode = #tpu.pipeline_mode<synchronous>, transform_indices = @transform_4, window_bounds = array<i64: 1, 128>}, {transform_indices = @transform_5, window_bounds = array<i64: 1, 256, 128>}]} {
    %c0 = arith.constant 0 : index
    %c0_0 = arith.constant 0 : index
    %0 = vector.load %arg2[%c0, %c0_0] : memref<9x128xf32, #tpu.memory_space<vmem>>, vector<9x128xf32>
    %cst = arith.constant 0.000000e+00 : f32
    %1 = vector.broadcast %cst : f32 to vector<384x128xf32>
    %cst_1 = arith.constant 0.000000e+00 : f32
    %2 = vector.broadcast %cst_1 : f32 to vector<16x24x128xf32>
    %c0_2 = arith.constant 0 : index
    %c0_3 = arith.constant 0 : index
    %c0_4 = arith.constant 0 : index
    %c0_5 = arith.constant 0 : index
    %3 = vector.load %arg1[%c0_2, %c0_3, %c0_4, %c0_5] : memref<1x18x24x128xbf16, #tpu.memory_space<vmem>>, vector<1x16x24x128xbf16>
    %4 = vector.shape_cast %3 : vector<1x16x24x128xbf16> to vector<16x24x128xbf16>
    %5 = vector.extract_strided_slice %0 {offsets = [0, 0], sizes = [1, 128], strides = [1, 1]} : vector<9x128xf32> to vector<1x128xf32>
    %6 = arith.extf %4 : vector<16x24x128xbf16> to vector<16x24x128xf32>
    %7 = vector.shape_cast %5 : vector<1x128xf32> to vector<1x1x128xf32>
    %8 = vector.broadcast %7 : vector<1x1x128xf32> to vector<16x24x128xf32>
    %9 = arith.mulf %6, %8 : vector<16x24x128xf32>
    %10 = arith.addf %2, %9 : vector<16x24x128xf32>
    %c0_6 = arith.constant 0 : index
    %c1 = arith.constant 1 : index
    %c0_7 = arith.constant 0 : index
    %c0_8 = arith.constant 0 : index
    %11 = vector.load %arg1[%c0_6, %c1, %c0_7, %c0_8] : memref<1x18x24x128xbf16, #tpu.memory_space<vmem>>, vector<1x16x24x128xbf16>
    %12 = vector.shape_cast %11 : vector<1x16x24x128xbf16> to vector<16x24x128xbf16>
    %13 = vector.extract_strided_slice %0 {offsets = [3, 0], sizes = [1, 128], strides = [1, 1]} : vector<9x128xf32> to vector<1x128xf32>
    %14 = arith.extf %12 : vector<16x24x128xbf16> to vector<16x24x128xf32>
    %15 = vector.shape_cast %13 : vector<1x128xf32> to vector<1x1x128xf32>
    %16 = vector.broadcast %15 : vector<1x1x128xf32> to vector<16x24x128xf32>
    %17 = arith.mulf %14, %16 : vector<16x24x128xf32>
    %18 = arith.addf %10, %17 : vector<16x24x128xf32>
    %c0_9 = arith.constant 0 : index
    %c2 = arith.constant 2 : index
    %c0_10 = arith.constant 0 : index
    %c0_11 = arith.constant 0 : index
    %19 = vector.load %arg1[%c0_9, %c2, %c0_10, %c0_11] : memref<1x18x24x128xbf16, #tpu.memory_space<vmem>>, vector<1x16x24x128xbf16>
    %20 = vector.shape_cast %19 : vector<1x16x24x128xbf16> to vector<16x24x128xbf16>
    %21 = vector.extract_strided_slice %0 {offsets = [6, 0], sizes = [1, 128], strides = [1, 1]} : vector<9x128xf32> to vector<1x128xf32>
    %22 = arith.extf %20 : vector<16x24x128xbf16> to vector<16x24x128xf32>
    %23 = vector.shape_cast %21 : vector<1x128xf32> to vector<1x1x128xf32>
    %24 = vector.broadcast %23 : vector<1x1x128xf32> to vector<16x24x128xf32>
    %25 = arith.mulf %22, %24 : vector<16x24x128xf32>
    %26 = arith.addf %18, %25 : vector<16x24x128xf32>
    %27 = vector.shape_cast %26 : vector<16x24x128xf32> to vector<384x128xf32>
    %28 = arith.addf %1, %27 : vector<384x128xf32>
    %cst_12 = arith.constant 0.000000e+00 : f32
    %29 = vector.broadcast %cst_12 : f32 to vector<16x24x128xf32>
    %c0_13 = arith.constant 0 : index
    %c0_14 = arith.constant 0 : index
    %c0_15 = arith.constant 0 : index
    %c0_16 = arith.constant 0 : index
    %30 = vector.load %arg1[%c0_13, %c0_14, %c0_15, %c0_16] : memref<1x18x24x128xbf16, #tpu.memory_space<vmem>>, vector<1x16x24x128xbf16>
    %31 = vector.shape_cast %30 : vector<1x16x24x128xbf16> to vector<16x24x128xbf16>
    %32 = vector.extract_strided_slice %0 {offsets = [1, 0], sizes = [1, 128], strides = [1, 1]} : vector<9x128xf32> to vector<1x128xf32>
    %33 = arith.extf %31 : vector<16x24x128xbf16> to vector<16x24x128xf32>
    %34 = vector.shape_cast %32 : vector<1x128xf32> to vector<1x1x128xf32>
    %35 = vector.broadcast %34 : vector<1x1x128xf32> to vector<16x24x128xf32>
    %36 = arith.mulf %33, %35 : vector<16x24x128xf32>
    %37 = arith.addf %29, %36 : vector<16x24x128xf32>
    %c0_17 = arith.constant 0 : index
    %c1_18 = arith.constant 1 : index
    %c0_19 = arith.constant 0 : index
    %c0_20 = arith.constant 0 : index
    %38 = vector.load %arg1[%c0_17, %c1_18, %c0_19, %c0_20] : memref<1x18x24x128xbf16, #tpu.memory_space<vmem>>, vector<1x16x24x128xbf16>
    %39 = vector.shape_cast %38 : vector<1x16x24x128xbf16> to vector<16x24x128xbf16>
    %40 = vector.extract_strided_slice %0 {offsets = [4, 0], sizes = [1, 128], strides = [1, 1]} : vector<9x128xf32> to vector<1x128xf32>
    %41 = arith.extf %39 : vector<16x24x128xbf16> to vector<16x24x128xf32>
    %42 = vector.shape_cast %40 : vector<1x128xf32> to vector<1x1x128xf32>
    %43 = vector.broadcast %42 : vector<1x1x128xf32> to vector<16x24x128xf32>
    %44 = arith.mulf %41, %43 : vector<16x24x128xf32>
    %45 = arith.addf %37, %44 : vector<16x24x128xf32>
    %c0_21 = arith.constant 0 : index
    %c2_22 = arith.constant 2 : index
    %c0_23 = arith.constant 0 : index
    %c0_24 = arith.constant 0 : index
    %46 = vector.load %arg1[%c0_21, %c2_22, %c0_23, %c0_24] : memref<1x18x24x128xbf16, #tpu.memory_space<vmem>>, vector<1x16x24x128xbf16>
    %47 = vector.shape_cast %46 : vector<1x16x24x128xbf16> to vector<16x24x128xbf16>
    %48 = vector.extract_strided_slice %0 {offsets = [7, 0], sizes = [1, 128], strides = [1, 1]} : vector<9x128xf32> to vector<1x128xf32>
    %49 = arith.extf %47 : vector<16x24x128xbf16> to vector<16x24x128xf32>
    %50 = vector.shape_cast %48 : vector<1x128xf32> to vector<1x1x128xf32>
    %51 = vector.broadcast %50 : vector<1x1x128xf32> to vector<16x24x128xf32>
    %52 = arith.mulf %49, %51 : vector<16x24x128xf32>
    %53 = arith.addf %45, %52 : vector<16x24x128xf32>
    %54 = vector.shape_cast %53 : vector<16x24x128xf32> to vector<384x128xf32>
    %c383_i32 = arith.constant 383 : i32
    %55 = tpu.dynamic_rotate %54 by %c383_i32 dim 0 : vector<384x128xf32>, i32 -> vector<384x128xf32>
    %56 = arith.addf %28, %55 : vector<384x128xf32>
    %cst_25 = arith.constant 0.000000e+00 : f32
    %57 = vector.broadcast %cst_25 : f32 to vector<16x24x128xf32>
    %c0_26 = arith.constant 0 : index
    %c0_27 = arith.constant 0 : index
    %c0_28 = arith.constant 0 : index
    %c0_29 = arith.constant 0 : index
    %58 = vector.load %arg1[%c0_26, %c0_27, %c0_28, %c0_29] : memref<1x18x24x128xbf16, #tpu.memory_space<vmem>>, vector<1x16x24x128xbf16>
    %59 = vector.shape_cast %58 : vector<1x16x24x128xbf16> to vector<16x24x128xbf16>
    %60 = vector.extract_strided_slice %0 {offsets = [2, 0], sizes = [1, 128], strides = [1, 1]} : vector<9x128xf32> to vector<1x128xf32>
    %61 = arith.extf %59 : vector<16x24x128xbf16> to vector<16x24x128xf32>
    %62 = vector.shape_cast %60 : vector<1x128xf32> to vector<1x1x128xf32>
    %63 = vector.broadcast %62 : vector<1x1x128xf32> to vector<16x24x128xf32>
    %64 = arith.mulf %61, %63 : vector<16x24x128xf32>
    %65 = arith.addf %57, %64 : vector<16x24x128xf32>
    %c0_30 = arith.constant 0 : index
    %c1_31 = arith.constant 1 : index
    %c0_32 = arith.constant 0 : index
    %c0_33 = arith.constant 0 : index
    %66 = vector.load %arg1[%c0_30, %c1_31, %c0_32, %c0_33] : memref<1x18x24x128xbf16, #tpu.memory_space<vmem>>, vector<1x16x24x128xbf16>
    %67 = vector.shape_cast %66 : vector<1x16x24x128xbf16> to vector<16x24x128xbf16>
    %68 = vector.extract_strided_slice %0 {offsets = [5, 0], sizes = [1, 128], strides = [1, 1]} : vector<9x128xf32> to vector<1x128xf32>
    %69 = arith.extf %67 : vector<16x24x128xbf16> to vector<16x24x128xf32>
    %70 = vector.shape_cast %68 : vector<1x128xf32> to vector<1x1x128xf32>
    %71 = vector.broadcast %70 : vector<1x1x128xf32> to vector<16x24x128xf32>
    %72 = arith.mulf %69, %71 : vector<16x24x128xf32>
    %73 = arith.addf %65, %72 : vector<16x24x128xf32>
    %c0_34 = arith.constant 0 : index
    %c2_35 = arith.constant 2 : index
    %c0_36 = arith.constant 0 : index
    %c0_37 = arith.constant 0 : index
    %74 = vector.load %arg1[%c0_34, %c2_35, %c0_36, %c0_37] : memref<1x18x24x128xbf16, #tpu.memory_space<vmem>>, vector<1x16x24x128xbf16>
    %75 = vector.shape_cast %74 : vector<1x16x24x128xbf16> to vector<16x24x128xbf16>
    %76 = vector.extract_strided_slice %0 {offsets = [8, 0], sizes = [1, 128], strides = [1, 1]} : vector<9x128xf32> to vector<1x128xf32>
    %77 = arith.extf %75 : vector<16x24x128xbf16> to vector<16x24x128xf32>
    %78 = vector.shape_cast %76 : vector<1x128xf32> to vector<1x1x128xf32>
    %79 = vector.broadcast %78 : vector<1x1x128xf32> to vector<16x24x128xf32>
    %80 = arith.mulf %77, %79 : vector<16x24x128xf32>
    %81 = arith.addf %73, %80 : vector<16x24x128xf32>
    %82 = vector.shape_cast %81 : vector<16x24x128xf32> to vector<384x128xf32>
    %c382_i32 = arith.constant 382 : i32
    %83 = tpu.dynamic_rotate %82 by %c382_i32 dim 0 : vector<384x128xf32>, i32 -> vector<384x128xf32>
    %84 = arith.addf %56, %83 : vector<384x128xf32>
    %c0_38 = arith.constant 0 : index
    %c0_39 = arith.constant 0 : index
    %85 = vector.load %arg3[%c0_38, %c0_39] : memref<1x128xf32, #tpu.memory_space<vmem>>, vector<1x128xf32>
    %86 = vector.broadcast %85 : vector<1x128xf32> to vector<384x128xf32>
    %87 = arith.addf %84, %86 : vector<384x128xf32>
    %88 = vector.shape_cast %87 : vector<384x128xf32> to vector<16x24x128xf32>
    %89 = vector.extract_strided_slice %88 {offsets = [0, 0, 0], sizes = [16, 16, 128], strides = [1, 1, 1]} : vector<16x24x128xf32> to vector<16x16x128xf32>
    %90 = vector.shape_cast %89 : vector<16x16x128xf32> to vector<256x128xf32>
    %91 = arith.truncf %90 : vector<256x128xf32> to vector<256x128xbf16>
    %c0_40 = arith.constant 0 : index
    %c0_41 = arith.constant 0 : index
    %92 = vector.load %arg4[%c0_40, %c0_41] : memref<128x128xbf16, #tpu.memory_space<vmem>>, vector<128x128xbf16>
    %cst_42 = arith.constant dense<0.000000e+00> : vector<256x128xf32>
    %93 = tpu.matmul %91, %92, %cst_42 {dimension_numbers = #tpu.dot_dimension_numbers<[1], [0], [0], [1], [0, 0, 1, 1], [], []>} : vector<256x128xbf16>, vector<128x128xbf16>, vector<256x128xf32> -> vector<256x128xf32>
    %c0_43 = arith.constant 0 : index
    %c0_44 = arith.constant 0 : index
    %94 = vector.load %arg5[%c0_43, %c0_44] : memref<1x128xf32, #tpu.memory_space<vmem>>, vector<1x128xf32>
    %95 = vector.broadcast %94 : vector<1x128xf32> to vector<256x128xf32>
    %96 = arith.addf %93, %95 : vector<256x128xf32>
    %c0_45 = arith.constant 0 : index
    %c0_46 = arith.constant 0 : index
    %c0_47 = arith.constant 0 : index
    %97 = vector.load %arg6[%c0_45, %c0_46, %c0_47] : memref<1x256x128xf32, #tpu.memory_space<vmem>>, vector<1x256x128xf32>
    %98 = vector.shape_cast %97 : vector<1x256x128xf32> to vector<256x128xf32>
    %99 = vector.shape_cast %96 : vector<256x128xf32> to vector<1x256x128xf32>
    tpu.vector_store %arg6[%c0_45, %c0_46, %c0_47], %99 {strides = array<i32>} : memref<1x256x128xf32, #tpu.memory_space<vmem>>, vector<1x256x128xf32>,
    return
  }
  func.func @transform_0(%arg0: i32) -> (i32, i32, i32, i32) {
    %c0_i32 = arith.constant 0 : i32
    %c0_i32_0 = arith.constant 0 : i32
    %c0_i32_1 = arith.constant 0 : i32
    %c0_i32_2 = arith.constant 0 : i32
    return %arg0, %c0_i32, %c0_i32_0, %c0_i32_1 : i32, i32, i32, i32
  }
  func.func @transform_1(%arg0: i32) -> (i32, i32) {
    %c0_i32 = arith.constant 0 : i32
    %c0_i32_0 = arith.constant 0 : i32
    %c0_i32_1 = arith.constant 0 : i32
    return %c0_i32, %c0_i32_0 : i32, i32
  }
  func.func @transform_2(%arg0: i32) -> (i32, i32) {
    %c0_i32 = arith.constant 0 : i32
    %c0_i32_0 = arith.constant 0 : i32
    %c0_i32_1 = arith.constant 0 : i32
    return %c0_i32, %c0_i32_0 : i32, i32
  }
  func.func @transform_3(%arg0: i32) -> (i32, i32) {
    %c0_i32 = arith.constant 0 : i32
    %c0_i32_0 = arith.constant 0 : i32
    %c0_i32_1 = arith.constant 0 : i32
    return %c0_i32, %c0_i32_0 : i32, i32
  }
  func.func @transform_4(%arg0: i32) -> (i32, i32) {
    %c0_i32 = arith.constant 0 : i32
    %c0_i32_0 = arith.constant 0 : i32
    %c0_i32_1 = arith.constant 0 : i32
    return %c0_i32, %c0_i32_0 : i32, i32
  }
  func.func @transform_5(%arg0: i32) -> (i32, i32, i32) {
    %c0_i32 = arith.constant 0 : i32
    %c0_i32_0 = arith.constant 0 : i32
    %c0_i32_1 = arith.constant 0 : i32
    return %arg0, %c0_i32, %c0_i32_0 : i32, i32, i32
  }
}

</mosaic_0001>

<llo_original>
// kernel: tpu_custom_call.1
$region0: #{tpu_custom_call.1}
  #allocation0 [shape = 'u32[]', space=smem, size = 0x4, offset = 0x4, fixed_abs, tag = 'smem constant byte address 0x4 - core index']
  #allocation1 [shape = 'u32[72,128]{1,0:T(1,128)}', space=vmem, size = 0x9000, scoped, tag = 'internal scratch']
  %s0 = inlined_call_operand.hbm [shape: bf16[2,18,24,128], index: 0, kind: input, shape index: {}]
  %s1 = inlined_call_operand.hbm [shape: f32[9,128], index: 1, kind: input, shape index: {}]
  %s2 = inlined_call_operand.vmem [shape: f32[1,128], index: 2, kind: input, shape index: {}]
  %s3 = inlined_call_operand.hbm [shape: bf16[128,128], index: 3, kind: input, shape index: {}]
  %s4 = inlined_call_operand.vmem [shape: f32[1,128], index: 4, kind: input, shape index: {}]
  %s5 = inlined_call_operand.hbm [shape: f32[2,256,128], index: 5, kind: output, shape index: {}]
  %s6 = sld [smem:[#allocation0]]
  $region65: #{tpu_custom_call.1} parent=0
    _
  %s8 = ssub.s32 1, %s6
  %s9 = scalar_select 0, %s8, %s6
  $region1: #{tpu_custom_call.1} parent=0
    #allocation2 [shape = 'u8[221184]{0}', space=vmem, size = 0x36000, scoped, tag = 'input window, operand 0']
    #allocation3 [shape = 's32[2]{0}', space=sflag, size = 0x8, scoped, tag = 'scoped memory for tpu_custom_call.1']
    #allocation4 [shape = 's32[2]{0}', space=sflag, size = 0x8, scoped, tag = 'scoped memory for tpu_custom_call.1']
    #allocation5 [shape = 'u8[8192]{0}', space=vmem, size = 0x2000, scoped, tag = 'input window, operand 1, single buffered']
    #allocation6 [shape = 's32[1]{0}', space=sflag, size = 0x4, scoped, tag = 'scoped memory for tpu_custom_call.1']
    #allocation7 [shape = 'u8[32768]{0}', space=vmem, size = 0x8000, scoped, tag = 'input window, operand 3, single buffered']
    #allocation8 [shape = 'u8[262144]{0}', space=vmem, size = 0x40000, scoped, tag = 'output window, operand 0']
    %10 = vsyncpa [#allocation3], 0
    %s11 = scalar_lea.sflag [#allocation3], 1
    %12 = vsyncpa %s11, 0
    %13 = vsyncpa [#allocation6], 0
    %14 = vsyncpa [#allocation4], 0
    %s15 = scalar_lea.sflag [#allocation4], 1
    %16 = vsyncpa %s15, 0
    loop: start=0, step=1, limit=4
    $region2: #{tpu_custom_call.1} parent=1 // loop_pre_header
      _
    $region3: #{tpu_custom_call.1} parent=1 // loop_header
      %s18 = sphi 0, %s22
      %p19 = scmp.ge.s32.totalorder %s18, 4
      %s28 = sphi 0, %s30
      %s31 = sphi 0, %s28
      %s32 = sphi 0, %s31
      %s48 = sphi 0, %s32
      %s52 = sphi 0, %s52
      %s54 = sphi 0, %s52
      %s55 = sphi 0, %s54
      %s69 = sphi 0, %s55
      %s73 = sphi 0, %s73
      %s75 = sphi 0, %s73
      %s76 = sphi 0, %s75
      %s90 = sphi 0, %s76
      %s94 = sphi 0, %s94
      %s96 = sphi 0, %s94
      %s97 = sphi 0, %s96
      %s111 = sphi 0, %s97
      %s115 = sphi 0, %s115
      %s117 = sphi 0, %s115
      %s118 = sphi 0, %s117
      %s132 = sphi 0, %s118
      %s138 = sphi 0, %s140
      %s141 = sphi 0, %s138
      %s142 = sphi 0, %s141
      %s158 = sphi 0, %s142
    $region4: #{tpu_custom_call.1} parent=1 // loop_header_branch
      %21 = sbr.rel (%p19) target = $region8
    $region5: #{tpu_custom_call.1} parent=1 // loop_body
      %s23 = ssub.s32 %s18, 1
      %s24 = ssub.s32 %s18, 2
      %s25 = sadd.s32 %s18, 1
      %s26 = ssub.s32 %s18, %s25
      %p27 = scmp.eq.s32.totalorder %s26, 0
      %s29 = sadd.s32 %s28, 1
      %s30 = scalar_select %p27, %s28, %s29
      %p33 = pneg %p27
      %p34 = scmp.eq.s32.totalorder %s18, 1
      %p35 = por %p33, %p34
      %p36 = scmp.ne.s32.totalorder %s28, %s31
      %p37 = scmp.eq.s32.totalorder %s18, 0
      %p38 = por %p36, %p37
      %p39 = scmp.ne.s32.totalorder %s28, %s31
      %p40 = scmp.eq.s32.totalorder %s23, 1
      %p41 = por %p39, %p40
      %p42 = scmp.ne.s32.totalorder %s31, %s32
      %p43 = scmp.eq.s32.totalorder %s23, 0
      %p44 = por %p42, %p43
      %p45 = scmp.ne.s32.totalorder %s31, %s32
      %p46 = scmp.eq.s32.totalorder %s24, 1
      %p47 = por %p45, %p46
      %p49 = scmp.ne.s32.totalorder %s32, %s48
      %p50 = scmp.eq.s32.totalorder %s24, 0
      %p51 = por %p49, %p50
      %s53 = sadd.s32 %s52, 1
      %p56 = scmp.eq.s32.totalorder %s18, 1
      %p57 = scmp.ne.s32.totalorder %s52, %s54
      %p58 = scmp.eq.s32.totalorder %s18, 0
      %p59 = por %p57, %p58
      %p60 = scmp.ne.s32.totalorder %s52, %s54
      %p61 = scmp.eq.s32.totalorder %s23, 1
      %p62 = por %p60, %p61
      %p63 = scmp.ne.s32.totalorder %s54, %s55
      %p64 = scmp.eq.s32.totalorder %s23, 0
      %p65 = por %p63, %p64
      %p66 = scmp.ne.s32.totalorder %s54, %s55
      %p67 = scmp.eq.s32.totalorder %s24, 1
      %p68 = por %p66, %p67
      %p70 = scmp.ne.s32.totalorder %s55, %s69
      %p71 = scmp.eq.s32.totalorder %s24, 0
      %p72 = por %p70, %p71
      %s74 = sadd.s32 %s73, 1
      %p77 = scmp.eq.s32.totalorder %s18, 1
      %p78 = scmp.ne.s32.totalorder %s73, %s75
      %p79 = scmp.eq.s32.totalorder %s18, 0
      %p80 = por %p78, %p79
      %p81 = scmp.ne.s32.totalorder %s73, %s75
      %p82 = scmp.eq.s32.totalorder %s23, 1
      %p83 = por %p81, %p82
      %p84 = scmp.ne.s32.totalorder %s75, %s76
      %p85 = scmp.eq.s32.totalorder %s23, 0
      %p86 = por %p84, %p85
      %p87 = scmp.ne.s32.totalorder %s75, %s76
      %p88 = scmp.eq.s32.totalorder %s24, 1
      %p89 = por %p87, %p88
      %p91 = scmp.ne.s32.totalorder %s76, %s90
      %p92 = scmp.eq.s32.totalorder %s24, 0
      %p93 = por %p91, %p92
      %s95 = sadd.s32 %s94, 1
      %p98 = scmp.eq.s32.totalorder %s18, 1
      %p99 = scmp.ne.s32.totalorder %s94, %s96
      %p100 = scmp.eq.s32.totalorder %s18, 0
      %p101 = por %p99, %p100
      %p102 = scmp.ne.s32.totalorder %s94, %s96
      %p103 = scmp.eq.s32.totalorder %s23, 1
      %p104 = por %p102, %p103
      %p105 = scmp.ne.s32.totalorder %s96, %s97
      %p106 = scmp.eq.s32.totalorder %s23, 0
      %p107 = por %p105, %p106
      %p108 = scmp.ne.s32.totalorder %s96, %s97
      %p109 = scmp.eq.s32.totalorder %s24, 1
      %p110 = por %p108, %p109
      %p112 = scmp.ne.s32.totalorder %s97, %s111
      %p113 = scmp.eq.s32.totalorder %s24, 0
      %p114 = por %p112, %p113
      %s116 = sadd.s32 %s115, 1
      %p119 = scmp.eq.s32.totalorder %s18, 1
      %p120 = scmp.ne.s32.totalorder %s115, %s117
      %p121 = scmp.eq.s32.totalorder %s18, 0
      %p122 = por %p120, %p121
      %p123 = scmp.ne.s32.totalorder %s115, %s117
      %p124 = scmp.eq.s32.totalorder %s23, 1
      %p125 = por %p123, %p124
      %p126 = scmp.ne.s32.totalorder %s117, %s118
      %p127 = scmp.eq.s32.totalorder %s23, 0
      %p128 = por %p126, %p127
      %p129 = scmp.ne.s32.totalorder %s117, %s118
      %p130 = scmp.eq.s32.totalorder %s24, 1
      %p131 = por %p129, %p130
      %p133 = scmp.ne.s32.totalorder %s118, %s132
      %p134 = scmp.eq.s32.totalorder %s24, 0
      %p135 = por %p133, %p134
      %s136 = ssub.s32 %s18, %s25
      %p137 = scmp.eq.s32.totalorder %s136, 0
      %s139 = sadd.s32 %s138, 1
      %s140 = scalar_select %p137, %s138, %s139
      %p143 = pneg %p137
      %p144 = scmp.eq.s32.totalorder %s18, 1
      %p145 = por %p143, %p144
      %p146 = scmp.ne.s32.totalorder %s138, %s141
      %p147 = scmp.eq.s32.totalorder %s18, 0
      %p148 = por %p146, %p147
      %p149 = scmp.ne.s32.totalorder %s138, %s141
      %p150 = scmp.eq.s32.totalorder %s23, 1
      %p151 = por %p149, %p150
      %p152 = scmp.ne.s32.totalorder %s141, %s142
      %p153 = scmp.eq.s32.totalorder %s23, 0
      %p154 = por %p152, %p153
      %p155 = scmp.ne.s32.totalorder %s141, %s142
      %p156 = scmp.eq.s32.totalorder %s24, 1
      %p157 = por %p155, %p156
      %p159 = scmp.ne.s32.totalorder %s142, %s158
      %p160 = scmp.eq.s32.totalorder %s24, 0
      %p161 = por %p159, %p160
      %p162 = scmp.le.s32.totalorder 1, %s18
      %p163 = scmp.lt.s32.totalorder %s18, 3
      %p164 = pnand %p162, %p163
      %p165 = pneg %p164
      // Predicated region
      $region9: #{tpu_custom_call.1} parent=5 // pred_check
        _
      $region10: #{tpu_custom_call.1} parent=5 // pred_check_branch
        %167 = sbr.rel (%p164) target = $region12
      $region11: #{tpu_custom_call.1} parent=5 // pred_region
        %s168 = ssub.s32 %s18, 1
        // Predicated region
        $region13: #{tpu_custom_call.1} parent=11 // pred_check
          %p169 = pneg %p65
        $region14: #{tpu_custom_call.1} parent=11 // pred_check_branch
          %171 = sbr.rel (%p169) target = $region16
        $region15: #{tpu_custom_call.1} parent=11 // pred_region
          %173 = vsyncadd [#allocation6], 0
          %s174 = sshll.u32 %s1, 4
          %s175 = int_to_ptr.hbm [resolvable:$true] %s174
          %s176 = sshll.u32 [#allocation5], 4
          %s177 = int_to_ptr.vmem [resolvable:$true] %s176
          %182 = dma.hbm_to_vmem [thread:$0]  %s175, 256, %s177, [#allocation6], 128, 128, 8
        $region16: #{tpu_custom_call.1} parent=11 // pred_fallthru
          _
        // Predicated region
        $region17: #{tpu_custom_call.1} parent=11 // pred_check
          %p183 = pneg %p86
        $region18: #{tpu_custom_call.1} parent=11 // pred_check_branch
          %185 = sbr.rel (%p183) target = $region20
        $region19: #{tpu_custom_call.1} parent=11 // pred_region
          _
        $region20: #{tpu_custom_call.1} parent=11 // pred_fallthru
          _
        // Predicated region
        $region21: #{tpu_custom_call.1} parent=11 // pred_check
          %p186 = pneg %p107
        $region22: #{tpu_custom_call.1} parent=11 // pred_check_branch
          %188 = sbr.rel (%p186) target = $region24
        $region23: #{tpu_custom_call.1} parent=11 // pred_region
          %190 = vsyncadd [#allocation6], 0
          %s191 = sshll.u32 %s3, 4
          %s192 = int_to_ptr.hbm [resolvable:$true] %s191
          %s193 = sshll.u32 [#allocation7], 4
          %s194 = int_to_ptr.vmem [resolvable:$true] %s193
          %199 = dma.hbm_to_vmem [thread:$0]  %s192, 1024, %s194, [#allocation6], 64, 64, 4
        $region24: #{tpu_custom_call.1} parent=11 // pred_fallthru
          _
        // Predicated region
        $region25: #{tpu_custom_call.1} parent=11 // pred_check
          %p200 = pneg %p128
        $region26: #{tpu_custom_call.1} parent=11 // pred_check_branch
          %202 = sbr.rel (%p200) target = $region28
        $region27: #{tpu_custom_call.1} parent=11 // pred_region
          _
        $region28: #{tpu_custom_call.1} parent=11 // pred_fallthru
          _
      $region12: #{tpu_custom_call.1} parent=5 // pred_fallthru
        _
      %p203 = scmp.lt.s32.totalorder %s18, 2
      // Predicated region
      $region29: #{tpu_custom_call.1} parent=5 // pred_check
        %p204 = pneg %p203
      $region30: #{tpu_custom_call.1} parent=5 // pred_check_branch
        %206 = sbr.rel (%p204) target = $region32
      $region31: #{tpu_custom_call.1} parent=5 // pred_region
        // Predicated region
        $region33: #{tpu_custom_call.1} parent=31 // pred_check
          %p207 = pneg %p38
        $region34: #{tpu_custom_call.1} parent=31 // pred_check_branch
          %209 = sbr.rel (%p207) target = $region36
        $region35: #{tpu_custom_call.1} parent=31 // pred_region
          %s210 = sand.u32 %s28, 1
          %s211 = scalar_lea.sflag [#allocation3], %s210
          %s212 = sand.u32 %s28, 1
          %s213 = smul.addr %s212, 216
          %s214 = scalar_lea.vmem [#allocation2], %s213
          %216 = vsyncadd %s211, 0
          %s217 = smul.addr %s18, 54
          %s218 = smul.addr %s217, 4
          %s219 = scalar_lea.hbm %s0, %s218
          %s220 = sshll.u32 %s219, 4
          %s221 = int_to_ptr.hbm [resolvable:$true] %s220
          %s222 = sshll.u32 %s214, 4
          %s223 = int_to_ptr.vmem [resolvable:$true] %s222
          %228 = dma.hbm_to_vmem [thread:$0]  %s221, 3456, %s223, %s211, 64, 64, 4
        $region36: #{tpu_custom_call.1} parent=31 // pred_fallthru
          _
      $region32: #{tpu_custom_call.1} parent=5 // pred_fallthru
        _
      %p229 = scmp.le.s32.totalorder 1, %s18
      %p230 = scmp.lt.s32.totalorder %s18, 3
      %p231 = pnand %p229, %p230
      %p232 = pneg %p231
      // Predicated region
      $region37: #{tpu_custom_call.1} parent=5 // pred_check
        _
      $region38: #{tpu_custom_call.1} parent=5 // pred_check_branch
        %234 = sbr.rel (%p231) target = $region40
      $region39: #{tpu_custom_call.1} parent=5 // pred_region
        %s235 = ssub.s32 %s18, 1
        %s236 = sand.u32 %s31, 1
        %s237 = scalar_lea.sflag [#allocation3], %s236
        %s238 = sand.u32 %s31, 1
        %s239 = smul.addr %s238, 216
        %s240 = scalar_lea.vmem [#allocation2], %s239
        // Predicated region
        $region41: #{tpu_custom_call.1} parent=39 // pred_check
          %p241 = pneg %p44
        $region42: #{tpu_custom_call.1} parent=39 // pred_check_branch
          %243 = sbr.rel (%p241) target = $region44
        $region43: #{tpu_custom_call.1} parent=39 // pred_region
          %245 = dma.done %s237, 3456
        $region44: #{tpu_custom_call.1} parent=39 // pred_fallthru
          _
        // Predicated region
        $region45: #{tpu_custom_call.1} parent=39 // pred_check
          %p246 = pneg %p65
        $region46: #{tpu_custom_call.1} parent=39 // pred_check_branch
          %248 = sbr.rel (%p246) target = $region48
        $region47: #{tpu_custom_call.1} parent=39 // pred_region
          %250 = dma.done [#allocation6], 256
        $region48: #{tpu_custom_call.1} parent=39 // pred_fallthru
          _
        // Predicated region
        $region49: #{tpu_custom_call.1} parent=39 // pred_check
          %p251 = pneg %p107
        $region50: #{tpu_custom_call.1} parent=39 // pred_check_branch
          %253 = sbr.rel (%p251) target = $region52
        $region51: #{tpu_custom_call.1} parent=39 // pred_region
          %255 = dma.done [#allocation6], 1024
        $region52: #{tpu_custom_call.1} parent=39 // pred_fallthru
          _
        %s256 = sand.u32 %s31, 1
        %s257 = scalar_lea.sflag [#allocation3], %s256
        %s258 = sand.u32 %s31, 1
        %s259 = smul.addr %s258, 216
        %s260 = scalar_lea.vmem [#allocation2], %s259
        %p261 = pneg %p44
        %p262 = pneg %p41
        %p263 = pneg %p65
        %p264 = pneg %p62
        %p265 = pneg %p86
        %p266 = pneg %p83
        %p267 = pneg %p107
        %p268 = pneg %p104
        %p269 = pneg %p128
        %p270 = pneg %p125
        %p271 = pneg %p154
        %p272 = pneg %p151
        %s273 = sand.u32 %s141, 1
        %s274 = scalar_lea.sflag [#allocation4], %s273
        %s275 = sand.u32 %s141, 1
        %s276 = smul.addr %s275, 256
        %s277 = scalar_lea.vmem [#allocation8], %s276
        %v278 = vld [vmem:[#allocation5] sm:$0xff]
        %v279 = vld [vmem:[#allocation5 + $0x8] sm:$0x1]
        %v280 = vld [vmem:[%s240] sm:$0xf]
        %v281 = vld [vmem:[%s240 + $0x4] sm:$0xf]
        %v282 = vld [vmem:[%s240 + $0x8] sm:$0xf]
        %v283 = vld [vmem:[%s240 + $0xc] sm:$0xf]
        %v284 = vld [vmem:[%s240 + $0x10] sm:$0xf]
        %v285 = vld [vmem:[%s240 + $0x14] sm:$0xf]
        %v286 = vld [vmem:[%s240 + $0x18] sm:$0xf]
        %v287 = vld [vmem:[%s240 + $0x1c] sm:$0xf]
        %v288 = vld [vmem:[%s240 + $0x20] sm:$0xf]
        %v289 = vld [vmem:[%s240 + $0x24] sm:$0xf]
        %v290 = vld [vmem:[%s240 + $0x28] sm:$0xf]
        %v291 = vld [vmem:[%s240 + $0x2c] sm:$0xf]
        %v292 = vld [vmem:[%s240 + $0x30] sm:$0xf]
        %v293 = vld [vmem:[%s240 + $0x34] sm:$0xf]
        %v294 = vld [vmem:[%s240 + $0x38] sm:$0xf]
        %v295 = vld [vmem:[%s240 + $0x3c] sm:$0xf]
        %v296 = vld [vmem:[%s240 + $0x40] sm:$0xf]
        %v297 = vld [vmem:[%s240 + $0x44] sm:$0xf]
        %v298 = vld [vmem:[%s240 + $0x48] sm:$0xf]
        %v299 = vld [vmem:[%s240 + $0x4c] sm:$0xf]
        %v300 = vld [vmem:[%s240 + $0x50] sm:$0xf]
        %v301 = vld [vmem:[%s240 + $0x54] sm:$0xf]
        %v302 = vld [vmem:[%s240 + $0x58] sm:$0xf]
        %v303 = vld [vmem:[%s240 + $0x5c] sm:$0xf]
        %v304 = vld [vmem:[%s240 + $0x60] sm:$0xf]
        %v305 = vld [vmem:[%s240 + $0x64] sm:$0xf]
        %v306 = vld [vmem:[%s240 + $0x68] sm:$0xf]
        %v307 = vld [vmem:[%s240 + $0x6c] sm:$0xf]
        %v308 = vld [vmem:[%s240 + $0x70] sm:$0xf]
        %v309 = vld [vmem:[%s240 + $0x74] sm:$0xf]
        %v310 = vld [vmem:[%s240 + $0x78] sm:$0xf]
        %v311 = vld [vmem:[%s240 + $0x7c] sm:$0xf]
        %v312 = vld [vmem:[%s240 + $0x80] sm:$0xf]
        %v313 = vld [vmem:[%s240 + $0x84] sm:$0xf]
        %v314 = vld [vmem:[%s240 + $0x88] sm:$0xf]
        %v315 = vld [vmem:[%s240 + $0x8c] sm:$0xf]
        %v316 = vld [vmem:[%s240 + $0x90] sm:$0xf]
        %v317 = vld [vmem:[%s240 + $0x94] sm:$0xf]
        %v318 = vld [vmem:[%s240 + $0x98] sm:$0xf]
        %v319 = vld [vmem:[%s240 + $0x9c] sm:$0xf]
        %v320 = vld [vmem:[%s240 + $0xa0] sm:$0xf]
        %v321 = vld [vmem:[%s240 + $0xa4] sm:$0xf]
        %v322 = vld [vmem:[%s240 + $0xa8] sm:$0xf]
        %v323 = vld [vmem:[%s240 + $0xac] sm:$0xf]
        %v324 = vld [vmem:[%s240 + $0xb0] sm:$0xf]
        %v325 = vld [vmem:[%s240 + $0xb4] sm:$0xf]
        %v326 = vld [vmem:[%s240 + $0xb8] sm:$0xf]
        %v327 = vld [vmem:[%s240 + $0xbc] sm:$0xf]
        %v328 = vunpack.c.l.bf16 %v280
        %v329 = vunpack.c.l.bf16 %v281
        %v330 = vunpack.c.l.bf16 %v282
        %v331 = vunpack.c.l.bf16 %v283
        %v332 = vunpack.c.l.bf16 %v284
        %v333 = vunpack.c.l.bf16 %v285
        %v334 = vunpack.c.l.bf16 %v286
        %v335 = vunpack.c.l.bf16 %v287
        %v336 = vunpack.c.l.bf16 %v288
        %v337 = vunpack.c.l.bf16 %v289
        %v338 = vunpack.c.l.bf16 %v290
        %v339 = vunpack.c.l.bf16 %v291
        %v340 = vunpack.c.l.bf16 %v292
        %v341 = vunpack.c.l.bf16 %v293
        %v342 = vunpack.c.l.bf16 %v294
        %v343 = vunpack.c.l.bf16 %v295
        %v344 = vunpack.c.l.bf16 %v296
        %v345 = vunpack.c.l.bf16 %v297
        %v346 = vunpack.c.l.bf16 %v298
        %v347 = vunpack.c.l.bf16 %v299
        %v348 = vunpack.c.l.bf16 %v300
        %v349 = vunpack.c.l.bf16 %v301
        %v350 = vunpack.c.l.bf16 %v302
        %v351 = vunpack.c.l.bf16 %v303
        %v352 = vunpack.c.l.bf16 %v304
        %v353 = vunpack.c.l.bf16 %v305
        %v354 = vunpack.c.l.bf16 %v306
        %v355 = vunpack.c.l.bf16 %v307
        %v356 = vunpack.c.l.bf16 %v308
        %v357 = vunpack.c.l.bf16 %v309
        %v358 = vunpack.c.l.bf16 %v310
        %v359 = vunpack.c.l.bf16 %v311
        %v360 = vunpack.c.l.bf16 %v312
        %v361 = vunpack.c.l.bf16 %v313
        %v362 = vunpack.c.l.bf16 %v314
        %v363 = vunpack.c.l.bf16 %v315
        %v364 = vunpack.c.l.bf16 %v316
        %v365 = vunpack.c.l.bf16 %v317
        %v366 = vunpack.c.l.bf16 %v318
        %v367 = vunpack.c.l.bf16 %v319
        %v368 = vunpack.c.l.bf16 %v320
        %v369 = vunpack.c.l.bf16 %v321
        %v370 = vunpack.c.l.bf16 %v322
        %v371 = vunpack.c.l.bf16 %v323
        %v372 = vunpack.c.l.bf16 %v324
        %v373 = vunpack.c.l.bf16 %v325
        %v374 = vunpack.c.l.bf16 %v326
        %v375 = vunpack.c.l.bf16 %v327
        %v376 = vperm.slane %v278, 0
        %v377 = vmul.f32 %v328, %v376
        %v378 = vmul.f32 %v329, %v376
        %v379 = vmul.f32 %v331, %v376
        %v380 = vmul.f32 %v332, %v376
        %v381 = vmul.f32 %v334, %v376
        %v382 = vmul.f32 %v335, %v376
        %v383 = vmul.f32 %v337, %v376
        %v384 = vmul.f32 %v338, %v376
        %v385 = vmul.f32 %v340, %v376
        %v386 = vmul.f32 %v341, %v376
        %v387 = vmul.f32 %v343, %v376
        %v388 = vmul.f32 %v344, %v376
        %v389 = vmul.f32 %v346, %v376
        %v390 = vmul.f32 %v347, %v376
        %v391 = vmul.f32 %v349, %v376
        %v392 = vmul.f32 %v350, %v376
        %v393 = vmul.f32 %v352, %v376
        %v394 = vmul.f32 %v353, %v376
        %v395 = vmul.f32 %v355, %v376
        %v396 = vmul.f32 %v356, %v376
        %v397 = vmul.f32 %v358, %v376
        %v398 = vmul.f32 %v359, %v376
        %v399 = vmul.f32 %v361, %v376
        %v400 = vmul.f32 %v362, %v376
        %v401 = vmul.f32 %v364, %v376
        %v402 = vmul.f32 %v365, %v376
        %v403 = vmul.f32 %v367, %v376
        %v404 = vmul.f32 %v368, %v376
        %v405 = vmul.f32 %v370, %v376
        %v406 = vmul.f32 %v371, %v376
        %v407 = vmul.f32 %v373, %v376
        %v408 = vmul.f32 %v374, %v376
        %v409 = vadd.f32 %v377, 0.0
        %v410 = vadd.f32 %v378, 0.0
        %v411 = vadd.f32 %v379, 0.0
        %v412 = vadd.f32 %v380, 0.0
        %v413 = vadd.f32 %v381, 0.0
        %v414 = vadd.f32 %v382, 0.0
        %v415 = vadd.f32 %v383, 0.0
        %v416 = vadd.f32 %v384, 0.0
        %v417 = vadd.f32 %v385, 0.0
        %v418 = vadd.f32 %v386, 0.0
        %v419 = vadd.f32 %v387, 0.0
        %v420 = vadd.f32 %v388, 0.0
        %v421 = vadd.f32 %v389, 0.0
        %v422 = vadd.f32 %v390, 0.0
        %v423 = vadd.f32 %v391, 0.0
        %v424 = vadd.f32 %v392, 0.0
        %v425 = vadd.f32 %v393, 0.0
        %v426 = vadd.f32 %v394, 0.0
        %v427 = vadd.f32 %v395, 0.0
        %v428 = vadd.f32 %v396, 0.0
        %v429 = vadd.f32 %v397, 0.0
        %v430 = vadd.f32 %v398, 0.0
        %v431 = vadd.f32 %v399, 0.0
        %v432 = vadd.f32 %v400, 0.0
        %v433 = vadd.f32 %v401, 0.0
        %v434 = vadd.f32 %v402, 0.0
        %v435 = vadd.f32 %v403, 0.0
        %v436 = vadd.f32 %v404, 0.0
        %v437 = vadd.f32 %v405, 0.0
        %v438 = vadd.f32 %v406, 0.0
        %v439 = vadd.f32 %v407, 0.0
        %v440 = vadd.f32 %v408, 0.0
        %s441 = scalar_lea.vmem %s240, 12 [#allocation2]
        %v442 = vld [vmem:[%s441] sm:$0xf]
        %v443 = vld [vmem:[%s441 + $0x4] sm:$0xf]
        %v444 = vld [vmem:[%s441 + $0x8] sm:$0xf]
        %v445 = vld [vmem:[%s441 + $0xc] sm:$0xf]
        %v446 = vld [vmem:[%s441 + $0x10] sm:$0xf]
        %v447 = vld [vmem:[%s441 + $0x14] sm:$0xf]
        %v448 = vld [vmem:[%s441 + $0x18] sm:$0xf]
        %v449 = vld [vmem:[%s441 + $0x1c] sm:$0xf]
        %v450 = vld [vmem:[%s441 + $0x20] sm:$0xf]
        %v451 = vld [vmem:[%s441 + $0x24] sm:$0xf]
        %v452 = vld [vmem:[%s441 + $0x28] sm:$0xf]
        %v453 = vld [vmem:[%s441 + $0x2c] sm:$0xf]
        %v454 = vld [vmem:[%s441 + $0x30] sm:$0xf]
        %v455 = vld [vmem:[%s441 + $0x34] sm:$0xf]
        %v456 = vld [vmem:[%s441 + $0x38] sm:$0xf]
        %v457 = vld [vmem:[%s441 + $0x3c] sm:$0xf]
        %v458 = vld [vmem:[%s441 + $0x40] sm:$0xf]
        %v459 = vld [vmem:[%s441 + $0x44] sm:$0xf]
        %v460 = vld [vmem:[%s441 + $0x48] sm:$0xf]
        %v461 = vld [vmem:[%s441 + $0x4c] sm:$0xf]
        %v462 = vld [vmem:[%s441 + $0x50] sm:$0xf]
        %v463 = vld [vmem:[%s441 + $0x54] sm:$0xf]
        %v464 = vld [vmem:[%s441 + $0x58] sm:$0xf]
        %v465 = vld [vmem:[%s441 + $0x5c] sm:$0xf]
        %v466 = vld [vmem:[%s441 + $0x60] sm:$0xf]
        %v467 = vld [vmem:[%s441 + $0x64] sm:$0xf]
        %v468 = vld [vmem:[%s441 + $0x68] sm:$0xf]
        %v469 = vld [vmem:[%s441 + $0x6c] sm:$0xf]
        %v470 = vld [vmem:[%s441 + $0x70] sm:$0xf]
        %v471 = vld [vmem:[%s441 + $0x74] sm:$0xf]
        %v472 = vld [vmem:[%s441 + $0x78] sm:$0xf]
        %v473 = vld [vmem:[%s441 + $0x7c] sm:$0xf]
        %v474 = vld [vmem:[%s441 + $0x80] sm:$0xf]
        %v475 = vld [vmem:[%s441 + $0x84] sm:$0xf]
        %v476 = vld [vmem:[%s441 + $0x88] sm:$0xf]
        %v477 = vld [vmem:[%s441 + $0x8c] sm:$0xf]
        %v478 = vld [vmem:[%s441 + $0x90] sm:$0xf]
        %v479 = vld [vmem:[%s441 + $0x94] sm:$0xf]
        %v480 = vld [vmem:[%s441 + $0x98] sm:$0xf]
        %v481 = vld [vmem:[%s441 + $0x9c] sm:$0xf]
        %v482 = vld [vmem:[%s441 + $0xa0] sm:$0xf]
        %v483 = vld [vmem:[%s441 + $0xa4] sm:$0xf]
        %v484 = vld [vmem:[%s441 + $0xa8] sm:$0xf]
        %v485 = vld [vmem:[%s441 + $0xac] sm:$0xf]
        %v486 = vld [vmem:[%s441 + $0xb0] sm:$0xf]
        %v487 = vld [vmem:[%s441 + $0xb4] sm:$0xf]
        %v488 = vld [vmem:[%s441 + $0xb8] sm:$0xf]
        %v489 = vld [vmem:[%s441 + $0xbc] sm:$0xf]
        %v490 = vunpack.c.l.bf16 %v442
        %v491 = vunpack.c.l.bf16 %v443
        %v492 = vunpack.c.l.bf16 %v444
        %v493 = vunpack.c.l.bf16 %v445
        %v494 = vunpack.c.l.bf16 %v446
        %v495 = vunpack.c.l.bf16 %v447
        %v496 = vunpack.c.l.bf16 %v448
        %v497 = vunpack.c.l.bf16 %v449
        %v498 = vunpack.c.l.bf16 %v450
        %v499 = vunpack.c.l.bf16 %v451
        %v500 = vunpack.c.l.bf16 %v452
        %v501 = vunpack.c.l.bf16 %v453
        %v502 = vunpack.c.l.bf16 %v454
        %v503 = vunpack.c.l.bf16 %v455
        %v504 = vunpack.c.l.bf16 %v456
        %v505 = vunpack.c.l.bf16 %v457
        %v506 = vunpack.c.l.bf16 %v458
        %v507 = vunpack.c.l.bf16 %v459
        %v508 = vunpack.c.l.bf16 %v460
        %v509 = vunpack.c.l.bf16 %v461
        %v510 = vunpack.c.l.bf16 %v462
        %v511 = vunpack.c.l.bf16 %v463
        %v512 = vunpack.c.l.bf16 %v464
        %v513 = vunpack.c.l.bf16 %v465
        %v514 = vunpack.c.l.bf16 %v466
        %v515 = vunpack.c.l.bf16 %v467
        %v516 = vunpack.c.l.bf16 %v468
        %v517 = vunpack.c.l.bf16 %v469
        %v518 = vunpack.c.l.bf16 %v470
        %v519 = vunpack.c.l.bf16 %v471
        %v520 = vunpack.c.l.bf16 %v472
        %v521 = vunpack.c.l.bf16 %v473
        %v522 = vunpack.c.l.bf16 %v474
        %v523 = vunpack.c.l.bf16 %v475
        %v524 = vunpack.c.l.bf16 %v476
        %v525 = vunpack.c.l.bf16 %v477
        %v526 = vunpack.c.l.bf16 %v478
        %v527 = vunpack.c.l.bf16 %v479
        %v528 = vunpack.c.l.bf16 %v480
        %v529 = vunpack.c.l.bf16 %v481
        %v530 = vunpack.c.l.bf16 %v482
        %v531 = vunpack.c.l.bf16 %v483
        %v532 = vunpack.c.l.bf16 %v484
        %v533 = vunpack.c.l.bf16 %v485
        %v534 = vunpack.c.l.bf16 %v486
        %v535 = vunpack.c.l.bf16 %v487
        %v536 = vunpack.c.l.bf16 %v488
        %v537 = vunpack.c.l.bf16 %v489
        %v538 = vperm.slane %v278, 3
        %v539 = vmul.f32 %v490, %v538
        %v540 = vmul.f32 %v491, %v538
        %v541 = vmul.f32 %v493, %v538
        %v542 = vmul.f32 %v494, %v538
        %v543 = vmul.f32 %v496, %v538
        %v544 = vmul.f32 %v497, %v538
        %v545 = vmul.f32 %v499, %v538
        %v546 = vmul.f32 %v500, %v538
        %v547 = vmul.f32 %v502, %v538
        %v548 = vmul.f32 %v503, %v538
        %v549 = vmul.f32 %v505, %v538
        %v550 = vmul.f32 %v506, %v538
        %v551 = vmul.f32 %v508, %v538
        %v552 = vmul.f32 %v509, %v538
        %v553 = vmul.f32 %v511, %v538
        %v554 = vmul.f32 %v512, %v538
        %v555 = vmul.f32 %v514, %v538
        %v556 = vmul.f32 %v515, %v538
        %v557 = vmul.f32 %v517, %v538
        %v558 = vmul.f32 %v518, %v538
        %v559 = vmul.f32 %v520, %v538
        %v560 = vmul.f32 %v521, %v538
        %v561 = vmul.f32 %v523, %v538
        %v562 = vmul.f32 %v524, %v538
        %v563 = vmul.f32 %v526, %v538
        %v564 = vmul.f32 %v527, %v538
        %v565 = vmul.f32 %v529, %v538
        %v566 = vmul.f32 %v530, %v538
        %v567 = vmul.f32 %v532, %v538
        %v568 = vmul.f32 %v533, %v538
        %v569 = vmul.f32 %v535, %v538
        %v570 = vmul.f32 %v536, %v538
        %v571 = vadd.f32 %v409, %v539
        %v572 = vadd.f32 %v410, %v540
        %v573 = vadd.f32 %v411, %v541
        %v574 = vadd.f32 %v412, %v542
        %v575 = vadd.f32 %v413, %v543
        %v576 = vadd.f32 %v414, %v544
        %v577 = vadd.f32 %v415, %v545
        %v578 = vadd.f32 %v416, %v546
        %v579 = vadd.f32 %v417, %v547
        %v580 = vadd.f32 %v418, %v548
        %v581 = vadd.f32 %v419, %v549
        %v582 = vadd.f32 %v420, %v550
        %v583 = vadd.f32 %v421, %v551
        %v584 = vadd.f32 %v422, %v552
        %v585 = vadd.f32 %v423, %v553
        %v586 = vadd.f32 %v424, %v554
        %v587 = vadd.f32 %v425, %v555
        %v588 = vadd.f32 %v426, %v556
        %v589 = vadd.f32 %v427, %v557
        %v590 = vadd.f32 %v428, %v558
        %v591 = vadd.f32 %v429, %v559
        %v592 = vadd.f32 %v430, %v560
        %v593 = vadd.f32 %v431, %v561
        %v594 = vadd.f32 %v432, %v562
        %v595 = vadd.f32 %v433, %v563
        %v596 = vadd.f32 %v434, %v564
        %v597 = vadd.f32 %v435, %v565
        %v598 = vadd.f32 %v436, %v566
        %v599 = vadd.f32 %v437, %v567
        %v600 = vadd.f32 %v438, %v568
        %v601 = vadd.f32 %v439, %v569
        %v602 = vadd.f32 %v440, %v570
        %s603 = scalar_lea.vmem %s240, 24 [#allocation2]
        %v604 = vld [vmem:[%s603] sm:$0xf]
        %v605 = vld [vmem:[%s603 + $0x4] sm:$0xf]
        %v606 = vld [vmem:[%s603 + $0x8] sm:$0xf]
        %v607 = vld [vmem:[%s603 + $0xc] sm:$0xf]
        %v608 = vld [vmem:[%s603 + $0x10] sm:$0xf]
        %v609 = vld [vmem:[%s603 + $0x14] sm:$0xf]
        %v610 = vld [vmem:[%s603 + $0x18] sm:$0xf]
        %v611 = vld [vmem:[%s603 + $0x1c] sm:$0xf]
        %v612 = vld [vmem:[%s603 + $0x20] sm:$0xf]
        %v613 = vld [vmem:[%s603 + $0x24] sm:$0xf]
        %v614 = vld [vmem:[%s603 + $0x28] sm:$0xf]
        %v615 = vld [vmem:[%s603 + $0x2c] sm:$0xf]
        %v616 = vld [vmem:[%s603 + $0x30] sm:$0xf]
        %v617 = vld [vmem:[%s603 + $0x34] sm:$0xf]
        %v618 = vld [vmem:[%s603 + $0x38] sm:$0xf]
        %v619 = vld [vmem:[%s603 + $0x3c] sm:$0xf]
        %v620 = vld [vmem:[%s603 + $0x40] sm:$0xf]
        %v621 = vld [vmem:[%s603 + $0x44] sm:$0xf]
        %v622 = vld [vmem:[%s603 + $0x48] sm:$0xf]
        %v623 = vld [vmem:[%s603 + $0x4c] sm:$0xf]
        %v624 = vld [vmem:[%s603 + $0x50] sm:$0xf]
        %v625 = vld [vmem:[%s603 + $0x54] sm:$0xf]
        %v626 = vld [vmem:[%s603 + $0x58] sm:$0xf]
        %v627 = vld [vmem:[%s603 + $0x5c] sm:$0xf]
        %v628 = vld [vmem:[%s603 + $0x60] sm:$0xf]
        %v629 = vld [vmem:[%s603 + $0x64] sm:$0xf]
        %v630 = vld [vmem:[%s603 + $0x68] sm:$0xf]
        %v631 = vld [vmem:[%s603 + $0x6c] sm:$0xf]
        %v632 = vld [vmem:[%s603 + $0x70] sm:$0xf]
        %v633 = vld [vmem:[%s603 + $0x74] sm:$0xf]
        %v634 = vld [vmem:[%s603 + $0x78] sm:$0xf]
        %v635 = vld [vmem:[%s603 + $0x7c] sm:$0xf]
        %v636 = vld [vmem:[%s603 + $0x80] sm:$0xf]
        %v637 = vld [vmem:[%s603 + $0x84] sm:$0xf]
        %v638 = vld [vmem:[%s603 + $0x88] sm:$0xf]
        %v639 = vld [vmem:[%s603 + $0x8c] sm:$0xf]
        %v640 = vld [vmem:[%s603 + $0x90] sm:$0xf]
        %v641 = vld [vmem:[%s603 + $0x94] sm:$0xf]
        %v642 = vld [vmem:[%s603 + $0x98] sm:$0xf]
        %v643 = vld [vmem:[%s603 + $0x9c] sm:$0xf]
        %v644 = vld [vmem:[%s603 + $0xa0] sm:$0xf]
        %v645 = vld [vmem:[%s603 + $0xa4] sm:$0xf]
        %v646 = vld [vmem:[%s603 + $0xa8] sm:$0xf]
        %v647 = vld [vmem:[%s603 + $0xac] sm:$0xf]
        %v648 = vld [vmem:[%s603 + $0xb0] sm:$0xf]
        %v649 = vld [vmem:[%s603 + $0xb4] sm:$0xf]
        %v650 = vld [vmem:[%s603 + $0xb8] sm:$0xf]
        %v651 = vld [vmem:[%s603 + $0xbc] sm:$0xf]
        %v652 = vunpack.c.l.bf16 %v604
        %v653 = vunpack.c.l.bf16 %v605
        %v654 = vunpack.c.l.bf16 %v606
        %v655 = vunpack.c.l.bf16 %v607
        %v656 = vunpack.c.l.bf16 %v608
        %v657 = vunpack.c.l.bf16 %v609
        %v658 = vunpack.c.l.bf16 %v610
        %v659 = vunpack.c.l.bf16 %v611
        %v660 = vunpack.c.l.bf16 %v612
        %v661 = vunpack.c.l.bf16 %v613
        %v662 = vunpack.c.l.bf16 %v614
        %v663 = vunpack.c.l.bf16 %v615
        %v664 = vunpack.c.l.bf16 %v616
        %v665 = vunpack.c.l.bf16 %v617
        %v666 = vunpack.c.l.bf16 %v618
        %v667 = vunpack.c.l.bf16 %v619
        %v668 = vunpack.c.l.bf16 %v620
        %v669 = vunpack.c.l.bf16 %v621
        %v670 = vunpack.c.l.bf16 %v622
        %v671 = vunpack.c.l.bf16 %v623
        %v672 = vunpack.c.l.bf16 %v624
        %v673 = vunpack.c.l.bf16 %v625
        %v674 = vunpack.c.l.bf16 %v626
        %v675 = vunpack.c.l.bf16 %v627
        %v676 = vunpack.c.l.bf16 %v628
        %v677 = vunpack.c.l.bf16 %v629
        %v678 = vunpack.c.l.bf16 %v630
        %v679 = vunpack.c.l.bf16 %v631
        %v680 = vunpack.c.l.bf16 %v632
        %v681 = vunpack.c.l.bf16 %v633
        %v682 = vunpack.c.l.bf16 %v634
        %v683 = vunpack.c.l.bf16 %v635
        %v684 = vunpack.c.l.bf16 %v636
        %v685 = vunpack.c.l.bf16 %v637
        %v686 = vunpack.c.l.bf16 %v638
        %v687 = vunpack.c.l.bf16 %v639
        %v688 = vunpack.c.l.bf16 %v640
        %v689 = vunpack.c.l.bf16 %v641
        %v690 = vunpack.c.l.bf16 %v642
        %v691 = vunpack.c.l.bf16 %v643
        %v692 = vunpack.c.l.bf16 %v644
        %v693 = vunpack.c.l.bf16 %v645
        %v694 = vunpack.c.l.bf16 %v646
        %v695 = vunpack.c.l.bf16 %v647
        %v696 = vunpack.c.l.bf16 %v648
        %v697 = vunpack.c.l.bf16 %v649
        %v698 = vunpack.c.l.bf16 %v650
        %v699 = vunpack.c.l.bf16 %v651
        %v700 = vperm.slane %v278, 6
        %v701 = vmul.f32 %v652, %v700
        %v702 = vmul.f32 %v653, %v700
        %v703 = vmul.f32 %v655, %v700
        %v704 = vmul.f32 %v656, %v700
        %v705 = vmul.f32 %v658, %v700
        %v706 = vmul.f32 %v659, %v700
        %v707 = vmul.f32 %v661, %v700
        %v708 = vmul.f32 %v662, %v700
        %v709 = vmul.f32 %v664, %v700
        %v710 = vmul.f32 %v665, %v700
        %v711 = vmul.f32 %v667, %v700
        %v712 = vmul.f32 %v668, %v700
        %v713 = vmul.f32 %v670, %v700
        %v714 = vmul.f32 %v671, %v700
        %v715 = vmul.f32 %v673, %v700
        %v716 = vmul.f32 %v674, %v700
        %v717 = vmul.f32 %v676, %v700
        %v718 = vmul.f32 %v677, %v700
        %v719 = vmul.f32 %v679, %v700
        %v720 = vmul.f32 %v680, %v700
        %v721 = vmul.f32 %v682, %v700
        %v722 = vmul.f32 %v683, %v700
        %v723 = vmul.f32 %v685, %v700
        %v724 = vmul.f32 %v686, %v700
        %v725 = vmul.f32 %v688, %v700
        %v726 = vmul.f32 %v689, %v700
        %v727 = vmul.f32 %v691, %v700
        %v728 = vmul.f32 %v692, %v700
        %v729 = vmul.f32 %v694, %v700
        %v730 = vmul.f32 %v695, %v700
        %v731 = vmul.f32 %v697, %v700
        %v732 = vmul.f32 %v698, %v700
        %v733 = vadd.f32 %v571, %v701
        %v734 = vadd.f32 %v572, %v702
        %v735 = vadd.f32 %v573, %v703
        %v736 = vadd.f32 %v574, %v704
        %v737 = vadd.f32 %v575, %v705
        %v738 = vadd.f32 %v576, %v706
        %v739 = vadd.f32 %v577, %v707
        %v740 = vadd.f32 %v578, %v708
        %v741 = vadd.f32 %v579, %v709
        %v742 = vadd.f32 %v580, %v710
        %v743 = vadd.f32 %v581, %v711
        %v744 = vadd.f32 %v582, %v712
        %v745 = vadd.f32 %v583, %v713
        %v746 = vadd.f32 %v584, %v714
        %v747 = vadd.f32 %v585, %v715
        %v748 = vadd.f32 %v586, %v716
        %v749 = vadd.f32 %v587, %v717
        %v750 = vadd.f32 %v588, %v718
        %v751 = vadd.f32 %v589, %v719
        %v752 = vadd.f32 %v590, %v720
        %v753 = vadd.f32 %v591, %v721
        %v754 = vadd.f32 %v592, %v722
        %v755 = vadd.f32 %v593, %v723
        %v756 = vadd.f32 %v594, %v724
        %v757 = vadd.f32 %v595, %v725
        %v758 = vadd.f32 %v596, %v726
        %v759 = vadd.f32 %v597, %v727
        %v760 = vadd.f32 %v598, %v728
        %v761 = vadd.f32 %v599, %v729
        %v762 = vadd.f32 %v600, %v730
        %v763 = vadd.f32 %v601, %v731
        %v764 = vadd.f32 %v602, %v732
        %v765 = vadd.f32 %v733, 0.0
        %v766 = vadd.f32 %v734, 0.0
        %v767 = vadd.f32 %v735, 0.0
        %v768 = vadd.f32 %v736, 0.0
        %v769 = vadd.f32 %v737, 0.0
        %v770 = vadd.f32 %v738, 0.0
        %v771 = vadd.f32 %v739, 0.0
        %v772 = vadd.f32 %v740, 0.0
        %v773 = vadd.f32 %v741, 0.0
        %v774 = vadd.f32 %v742, 0.0
        %v775 = vadd.f32 %v743, 0.0
        %v776 = vadd.f32 %v744, 0.0
        %v777 = vadd.f32 %v745, 0.0
        %v778 = vadd.f32 %v746, 0.0
        %v779 = vadd.f32 %v747, 0.0
        %v780 = vadd.f32 %v748, 0.0
        %v781 = vadd.f32 %v749, 0.0
        %v782 = vadd.f32 %v750, 0.0
        %v783 = vadd.f32 %v751, 0.0
        %v784 = vadd.f32 %v752, 0.0
        %v785 = vadd.f32 %v753, 0.0
        %v786 = vadd.f32 %v754, 0.0
        %v787 = vadd.f32 %v755, 0.0
        %v788 = vadd.f32 %v756, 0.0
        %v789 = vadd.f32 %v757, 0.0
        %v790 = vadd.f32 %v758, 0.0
        %v791 = vadd.f32 %v759, 0.0
        %v792 = vadd.f32 %v760, 0.0
        %v793 = vadd.f32 %v761, 0.0
        %v794 = vadd.f32 %v762, 0.0
        %v795 = vadd.f32 %v763, 0.0
        %v796 = vadd.f32 %v764, 0.0
        %v797 = vperm.slane %v278, 1
        %v798 = vmul.f32 %v328, %v797
        %v799 = vmul.f32 %v329, %v797
        %v800 = vmul.f32 %v330, %v797
        %v801 = vmul.f32 %v331, %v797
        %v802 = vmul.f32 %v332, %v797
        %v803 = vmul.f32 %v333, %v797
        %v804 = vmul.f32 %v334, %v797
        %v805 = vmul.f32 %v335, %v797
        %v806 = vmul.f32 %v336, %v797
        %v807 = vmul.f32 %v337, %v797
        %v808 = vmul.f32 %v338, %v797
        %v809 = vmul.f32 %v339, %v797
        %v810 = vmul.f32 %v340, %v797
        %v811 = vmul.f32 %v341, %v797
        %v812 = vmul.f32 %v342, %v797
        %v813 = vmul.f32 %v343, %v797
        %v814 = vmul.f32 %v344, %v797
        %v815 = vmul.f32 %v345, %v797
        %v816 = vmul.f32 %v346, %v797
        %v817 = vmul.f32 %v347, %v797
        %v818 = vmul.f32 %v348, %v797
        %v819 = vmul.f32 %v349, %v797
        %v820 = vmul.f32 %v350, %v797
        %v821 = vmul.f32 %v351, %v797
        %v822 = vmul.f32 %v352, %v797
        %v823 = vmul.f32 %v353, %v797
        %v824 = vmul.f32 %v354, %v797
        %v825 = vmul.f32 %v355, %v797
        %v826 = vmul.f32 %v356, %v797
        %v827 = vmul.f32 %v357, %v797
        %v828 = vmul.f32 %v358, %v797
        %v829 = vmul.f32 %v359, %v797
        %v830 = vmul.f32 %v360, %v797
        %v831 = vmul.f32 %v361, %v797
        %v832 = vmul.f32 %v362, %v797
        %v833 = vmul.f32 %v363, %v797
        %v834 = vmul.f32 %v364, %v797
        %v835 = vmul.f32 %v365, %v797
        %v836 = vmul.f32 %v366, %v797
        %v837 = vmul.f32 %v367, %v797
        %v838 = vmul.f32 %v368, %v797
        %v839 = vmul.f32 %v369, %v797
        %v840 = vmul.f32 %v370, %v797
        %v841 = vmul.f32 %v371, %v797
        %v842 = vmul.f32 %v372, %v797
        %v843 = vmul.f32 %v373, %v797
        %v844 = vmul.f32 %v374, %v797
        %v845 = vmul.f32 %v375, %v797
        %v846 = vadd.f32 %v798, 0.0
        %v847 = vadd.f32 %v799, 0.0
        %v848 = vadd.f32 %v800, 0.0
        %v849 = vadd.f32 %v801, 0.0
        %v850 = vadd.f32 %v802, 0.0
        %v851 = vadd.f32 %v803, 0.0
        %v852 = vadd.f32 %v804, 0.0
        %v853 = vadd.f32 %v805, 0.0
        %v854 = vadd.f32 %v806, 0.0
        %v855 = vadd.f32 %v807, 0.0
        %v856 = vadd.f32 %v808, 0.0
        %v857 = vadd.f32 %v809, 0.0
        %v858 = vadd.f32 %v810, 0.0
        %v859 = vadd.f32 %v811, 0.0
        %v860 = vadd.f32 %v812, 0.0
        %v861 = vadd.f32 %v813, 0.0
        %v862 = vadd.f32 %v814, 0.0
        %v863 = vadd.f32 %v815, 0.0
        %v864 = vadd.f32 %v816, 0.0
        %v865 = vadd.f32 %v817, 0.0
        %v866 = vadd.f32 %v818, 0.0
        %v867 = vadd.f32 %v819, 0.0
        %v868 = vadd.f32 %v820, 0.0
        %v869 = vadd.f32 %v821, 0.0
        %v870 = vadd.f32 %v822, 0.0
        %v871 = vadd.f32 %v823, 0.0
        %v872 = vadd.f32 %v824, 0.0
        %v873 = vadd.f32 %v825, 0.0
        %v874 = vadd.f32 %v826, 0.0
        %v875 = vadd.f32 %v827, 0.0
        %v876 = vadd.f32 %v828, 0.0
        %v877 = vadd.f32 %v829, 0.0
        %v878 = vadd.f32 %v830, 0.0
        %v879 = vadd.f32 %v831, 0.0
        %v880 = vadd.f32 %v832, 0.0
        %v881 = vadd.f32 %v833, 0.0
        %v882 = vadd.f32 %v834, 0.0
        %v883 = vadd.f32 %v835, 0.0
        %v884 = vadd.f32 %v836, 0.0
        %v885 = vadd.f32 %v837, 0.0
        %v886 = vadd.f32 %v838, 0.0
        %v887 = vadd.f32 %v839, 0.0
        %v888 = vadd.f32 %v840, 0.0
        %v889 = vadd.f32 %v841, 0.0
        %v890 = vadd.f32 %v842, 0.0
        %v891 = vadd.f32 %v843, 0.0
        %v892 = vadd.f32 %v844, 0.0
        %v893 = vadd.f32 %v845, 0.0
        %v894 = vperm.slane %v278, 4
        %v895 = vmul.f32 %v490, %v894
        %v896 = vmul.f32 %v491, %v894
        %v897 = vmul.f32 %v492, %v894
        %v898 = vmul.f32 %v493, %v894
        %v899 = vmul.f32 %v494, %v894
        %v900 = vmul.f32 %v495, %v894
        %v901 = vmul.f32 %v496, %v894
        %v902 = vmul.f32 %v497, %v894
        %v903 = vmul.f32 %v498, %v894
        %v904 = vmul.f32 %v499, %v894
        %v905 = vmul.f32 %v500, %v894
        %v906 = vmul.f32 %v501, %v894
        %v907 = vmul.f32 %v502, %v894
        %v908 = vmul.f32 %v503, %v894
        %v909 = vmul.f32 %v504, %v894
        %v910 = vmul.f32 %v505, %v894
        %v911 = vmul.f32 %v506, %v894
        %v912 = vmul.f32 %v507, %v894
        %v913 = vmul.f32 %v508, %v894
        %v914 = vmul.f32 %v509, %v894
        %v915 = vmul.f32 %v510, %v894
        %v916 = vmul.f32 %v511, %v894
        %v917 = vmul.f32 %v512, %v894
        %v918 = vmul.f32 %v513, %v894
        %v919 = vmul.f32 %v514, %v894
        %v920 = vmul.f32 %v515, %v894
        %v921 = vmul.f32 %v516, %v894
        %v922 = vmul.f32 %v517, %v894
        %v923 = vmul.f32 %v518, %v894
        %v924 = vmul.f32 %v519, %v894
        %v925 = vmul.f32 %v520, %v894
        %v926 = vmul.f32 %v521, %v894
        %v927 = vmul.f32 %v522, %v894
        %v928 = vmul.f32 %v523, %v894
        %v929 = vmul.f32 %v524, %v894
        %v930 = vmul.f32 %v525, %v894
        %v931 = vmul.f32 %v526, %v894
        %v932 = vmul.f32 %v527, %v894
        %v933 = vmul.f32 %v528, %v894
        %v934 = vmul.f32 %v529, %v894
        %v935 = vmul.f32 %v530, %v894
        %v936 = vmul.f32 %v531, %v894
        %v937 = vmul.f32 %v532, %v894
        %v938 = vmul.f32 %v533, %v894
        %v939 = vmul.f32 %v534, %v894
        %v940 = vmul.f32 %v535, %v894
        %v941 = vmul.f32 %v536, %v894
        %v942 = vmul.f32 %v537, %v894
        %v943 = vadd.f32 %v846, %v895
        %v944 = vadd.f32 %v847, %v896
        %v945 = vadd.f32 %v848, %v897
        %v946 = vadd.f32 %v849, %v898
        %v947 = vadd.f32 %v850, %v899
        %v948 = vadd.f32 %v851, %v900
        %v949 = vadd.f32 %v852, %v901
        %v950 = vadd.f32 %v853, %v902
        %v951 = vadd.f32 %v854, %v903
        %v952 = vadd.f32 %v855, %v904
        %v953 = vadd.f32 %v856, %v905
        %v954 = vadd.f32 %v857, %v906
        %v955 = vadd.f32 %v858, %v907
        %v956 = vadd.f32 %v859, %v908
        %v957 = vadd.f32 %v860, %v909
        %v958 = vadd.f32 %v861, %v910
        %v959 = vadd.f32 %v862, %v911
        %v960 = vadd.f32 %v863, %v912
        %v961 = vadd.f32 %v864, %v913
        %v962 = vadd.f32 %v865, %v914
        %v963 = vadd.f32 %v866, %v915
        %v964 = vadd.f32 %v867, %v916
        %v965 = vadd.f32 %v868, %v917
        %v966 = vadd.f32 %v869, %v918
        %v967 = vadd.f32 %v870, %v919
        %v968 = vadd.f32 %v871, %v920
        %v969 = vadd.f32 %v872, %v921
        %v970 = vadd.f32 %v873, %v922
        %v971 = vadd.f32 %v874, %v923
        %v972 = vadd.f32 %v875, %v924
        %v973 = vadd.f32 %v876, %v925
        %v974 = vadd.f32 %v877, %v926
        %v975 = vadd.f32 %v878, %v927
        %v976 = vadd.f32 %v879, %v928
        %v977 = vadd.f32 %v880, %v929
        %v978 = vadd.f32 %v881, %v930
        %v979 = vadd.f32 %v882, %v931
        %v980 = vadd.f32 %v883, %v932
        %v981 = vadd.f32 %v884, %v933
        %v982 = vadd.f32 %v885, %v934
        %v983 = vadd.f32 %v886, %v935
        %v984 = vadd.f32 %v887, %v936
        %v985 = vadd.f32 %v888, %v937
        %v986 = vadd.f32 %v889, %v938
        %v987 = vadd.f32 %v890, %v939
        %v988 = vadd.f32 %v891, %v940
        %v989 = vadd.f32 %v892, %v941
        %v990 = vadd.f32 %v893, %v942
        %v991 = vperm.slane %v278, 7
        %v992 = vmul.f32 %v652, %v991
        %v993 = vmul.f32 %v653, %v991
        %v994 = vmul.f32 %v654, %v991
        %v995 = vmul.f32 %v655, %v991
        %v996 = vmul.f32 %v656, %v991
        %v997 = vmul.f32 %v657, %v991
        %v998 = vmul.f32 %v658, %v991
        %v999 = vmul.f32 %v659, %v991
        %v1000 = vmul.f32 %v660, %v991
        %v1001 = vmul.f32 %v661, %v991
        %v1002 = vmul.f32 %v662, %v991
        %v1003 = vmul.f32 %v663, %v991
        %v1004 = vmul.f32 %v664, %v991
        %v1005 = vmul.f32 %v665, %v991
        %v1006 = vmul.f32 %v666, %v991
        %v1007 = vmul.f32 %v667, %v991
        %v1008 = vmul.f32 %v668, %v991
        %v1009 = vmul.f32 %v669, %v991
        %v1010 = vmul.f32 %v670, %v991
        %v1011 = vmul.f32 %v671, %v991
        %v1012 = vmul.f32 %v672, %v991
        %v1013 = vmul.f32 %v673, %v991
        %v1014 = vmul.f32 %v674, %v991
        %v1015 = vmul.f32 %v675, %v991
        %v1016 = vmul.f32 %v676, %v991
        %v1017 = vmul.f32 %v677, %v991
        %v1018 = vmul.f32 %v678, %v991
        %v1019 = vmul.f32 %v679, %v991
        %v1020 = vmul.f32 %v680, %v991
        %v1021 = vmul.f32 %v681, %v991
        %v1022 = vmul.f32 %v682, %v991
        %v1023 = vmul.f32 %v683, %v991
        %v1024 = vmul.f32 %v684, %v991
        %v1025 = vmul.f32 %v685, %v991
        %v1026 = vmul.f32 %v686, %v991
        %v1027 = vmul.f32 %v687, %v991
        %v1028 = vmul.f32 %v688, %v991
        %v1029 = vmul.f32 %v689, %v991
        %v1030 = vmul.f32 %v690, %v991
        %v1031 = vmul.f32 %v691, %v991
        %v1032 = vmul.f32 %v692, %v991
        %v1033 = vmul.f32 %v693, %v991
        %v1034 = vmul.f32 %v694, %v991
        %v1035 = vmul.f32 %v695, %v991
        %v1036 = vmul.f32 %v696, %v991
        %v1037 = vmul.f32 %v697, %v991
        %v1038 = vmul.f32 %v698, %v991
        %v1039 = vmul.f32 %v699, %v991
        %v1040 = vadd.f32 %v943, %v992
        %v1041 = vadd.f32 %v944, %v993
        %v1042 = vadd.f32 %v945, %v994
        %v1043 = vadd.f32 %v946, %v995
        %v1044 = vadd.f32 %v947, %v996
        %v1045 = vadd.f32 %v948, %v997
        %v1046 = vadd.f32 %v949, %v998
        %v1047 = vadd.f32 %v950, %v999
        %v1048 = vadd.f32 %v951, %v1000
        %v1049 = vadd.f32 %v952, %v1001
        %v1050 = vadd.f32 %v953, %v1002
        %v1051 = vadd.f32 %v954, %v1003
        %v1052 = vadd.f32 %v955, %v1004
        %v1053 = vadd.f32 %v956, %v1005
        %v1054 = vadd.f32 %v957, %v1006
        %v1055 = vadd.f32 %v958, %v1007
        %v1056 = vadd.f32 %v959, %v1008
        %v1057 = vadd.f32 %v960, %v1009
        %v1058 = vadd.f32 %v961, %v1010
        %v1059 = vadd.f32 %v962, %v1011
        %v1060 = vadd.f32 %v963, %v1012
        %v1061 = vadd.f32 %v964, %v1013
        %v1062 = vadd.f32 %v965, %v1014
        %v1063 = vadd.f32 %v966, %v1015
        %v1064 = vadd.f32 %v967, %v1016
        %v1065 = vadd.f32 %v968, %v1017
        %v1066 = vadd.f32 %v969, %v1018
        %v1067 = vadd.f32 %v970, %v1019
        %v1068 = vadd.f32 %v971, %v1020
        %v1069 = vadd.f32 %v972, %v1021
        %v1070 = vadd.f32 %v973, %v1022
        %v1071 = vadd.f32 %v974, %v1023
        %v1072 = vadd.f32 %v975, %v1024
        %v1073 = vadd.f32 %v976, %v1025
        %v1074 = vadd.f32 %v977, %v1026
        %v1075 = vadd.f32 %v978, %v1027
        %v1076 = vadd.f32 %v979, %v1028
        %v1077 = vadd.f32 %v980, %v1029
        %v1078 = vadd.f32 %v981, %v1030
        %v1079 = vadd.f32 %v982, %v1031
        %v1080 = vadd.f32 %v983, %v1032
        %v1081 = vadd.f32 %v984, %v1033
        %v1082 = vadd.f32 %v985, %v1034
        %v1083 = vadd.f32 %v986, %v1035
        %v1084 = vadd.f32 %v987, %v1036
        %v1085 = vadd.f32 %v988, %v1037
        %v1086 = vadd.f32 %v989, %v1038
        %v1087 = vadd.f32 %v990, %v1039
        %v1088 = vrot.slane %v1040, 1
        %v1089 = vrot.slane %v1041, 1
        %v1090 = vrot.slane %v1042, 1
        %v1091 = vrot.slane %v1043, 1
        %v1092 = vrot.slane %v1044, 1
        %v1093 = vrot.slane %v1045, 1
        %v1094 = vrot.slane %v1046, 1
        %v1095 = vrot.slane %v1047, 1
        %v1096 = vrot.slane %v1048, 1
        %v1097 = vrot.slane %v1049, 1
        %v1098 = vrot.slane %v1050, 1
        %v1099 = vrot.slane %v1051, 1
        %v1100 = vrot.slane %v1052, 1
        %v1101 = vrot.slane %v1053, 1
        %v1102 = vrot.slane %v1054, 1
        %v1103 = vrot.slane %v1055, 1
        %v1104 = vrot.slane %v1056, 1
        %v1105 = vrot.slane %v1057, 1
        %v1106 = vrot.slane %v1058, 1
        %v1107 = vrot.slane %v1059, 1
        %v1108 = vrot.slane %v1060, 1
        %v1109 = vrot.slane %v1061, 1
        %v1110 = vrot.slane %v1062, 1
        %v1111 = vrot.slane %v1063, 1
        %v1112 = vrot.slane %v1064, 1
        %v1113 = vrot.slane %v1065, 1
        %v1114 = vrot.slane %v1066, 1
        %v1115 = vrot.slane %v1067, 1
        %v1116 = vrot.slane %v1068, 1
        %v1117 = vrot.slane %v1069, 1
        %v1118 = vrot.slane %v1070, 1
        %v1119 = vrot.slane %v1071, 1
        %v1120 = vrot.slane %v1072, 1
        %v1121 = vrot.slane %v1073, 1
        %v1122 = vrot.slane %v1074, 1
        %v1123 = vrot.slane %v1075, 1
        %v1124 = vrot.slane %v1076, 1
        %v1125 = vrot.slane %v1077, 1
        %v1126 = vrot.slane %v1078, 1
        %v1127 = vrot.slane %v1079, 1
        %v1128 = vrot.slane %v1080, 1
        %v1129 = vrot.slane %v1081, 1
        %v1130 = vrot.slane %v1082, 1
        %v1131 = vrot.slane %v1083, 1
        %v1132 = vrot.slane %v1084, 1
        %v1133 = vrot.slane %v1085, 1
        %v1134 = vrot.slane %v1086, 1
        %v1135 = vrot.slane %v1087, 1
        %v1136 = vlaneseq
        %v1137 = vshrl.u32 %v1136, 7
        %vm1138 = vcmp.lt.s32.totalorder %v1137, 7
        %v1139 = vsel %vm1138, %v1134, %v1135
        %v1140 = vsel %vm1138, %v1133, %v1134
        %v1141 = vsel %vm1138, %v1131, %v1132
        %v1142 = vsel %vm1138, %v1130, %v1131
        %v1143 = vsel %vm1138, %v1128, %v1129
        %v1144 = vsel %vm1138, %v1127, %v1128
        %v1145 = vsel %vm1138, %v1125, %v1126
        %v1146 = vsel %vm1138, %v1124, %v1125
        %v1147 = vsel %vm1138, %v1122, %v1123
        %v1148 = vsel %vm1138, %v1121, %v1122
        %v1149 = vsel %vm1138, %v1119, %v1120
        %v1150 = vsel %vm1138, %v1118, %v1119
        %v1151 = vsel %vm1138, %v1116, %v1117
        %v1152 = vsel %vm1138, %v1115, %v1116
        %v1153 = vsel %vm1138, %v1113, %v1114
        %v1154 = vsel %vm1138, %v1112, %v1113
        %v1155 = vsel %vm1138, %v1110, %v1111
        %v1156 = vsel %vm1138, %v1109, %v1110
        %v1157 = vsel %vm1138, %v1107, %v1108
        %v1158 = vsel %vm1138, %v1106, %v1107
        %v1159 = vsel %vm1138, %v1104, %v1105
        %v1160 = vsel %vm1138, %v1103, %v1104
        %v1161 = vsel %vm1138, %v1101, %v1102
        %v1162 = vsel %vm1138, %v1100, %v1101
        %v1163 = vsel %vm1138, %v1098, %v1099
        %v1164 = vsel %vm1138, %v1097, %v1098
        %v1165 = vsel %vm1138, %v1095, %v1096
        %v1166 = vsel %vm1138, %v1094, %v1095
        %v1167 = vsel %vm1138, %v1092, %v1093
        %v1168 = vsel %vm1138, %v1091, %v1092
        %v1169 = vsel %vm1138, %v1089, %v1090
        %v1170 = vsel %vm1138, %v1088, %v1089
        %v1171 = vadd.f32 %v765, %v1170
        %v1172 = vadd.f32 %v766, %v1169
        %v1173 = vadd.f32 %v767, %v1168
        %v1174 = vadd.f32 %v768, %v1167
        %v1175 = vadd.f32 %v769, %v1166
        %v1176 = vadd.f32 %v770, %v1165
        %v1177 = vadd.f32 %v771, %v1164
        %v1178 = vadd.f32 %v772, %v1163
        %v1179 = vadd.f32 %v773, %v1162
        %v1180 = vadd.f32 %v774, %v1161
        %v1181 = vadd.f32 %v775, %v1160
        %v1182 = vadd.f32 %v776, %v1159
        %v1183 = vadd.f32 %v777, %v1158
        %v1184 = vadd.f32 %v778, %v1157
        %v1185 = vadd.f32 %v779, %v1156
        %v1186 = vadd.f32 %v780, %v1155
        %v1187 = vadd.f32 %v781, %v1154
        %v1188 = vadd.f32 %v782, %v1153
        %v1189 = vadd.f32 %v783, %v1152
        %v1190 = vadd.f32 %v784, %v1151
        %v1191 = vadd.f32 %v785, %v1150
        %v1192 = vadd.f32 %v786, %v1149
        %v1193 = vadd.f32 %v787, %v1148
        %v1194 = vadd.f32 %v788, %v1147
        %v1195 = vadd.f32 %v789, %v1146
        %v1196 = vadd.f32 %v790, %v1145
        %v1197 = vadd.f32 %v791, %v1144
        %v1198 = vadd.f32 %v792, %v1143
        %v1199 = vadd.f32 %v793, %v1142
        %v1200 = vadd.f32 %v794, %v1141
        %v1201 = vadd.f32 %v795, %v1140
        %v1202 = vadd.f32 %v796, %v1139
        %v1203 = vperm.slane %v278, 2
        %v1204 = vmul.f32 %v328, %v1203
        %v1205 = vmul.f32 %v329, %v1203
        %v1206 = vmul.f32 %v330, %v1203
        %v1207 = vmul.f32 %v331, %v1203
        %v1208 = vmul.f32 %v332, %v1203
        %v1209 = vmul.f32 %v333, %v1203
        %v1210 = vmul.f32 %v334, %v1203
        %v1211 = vmul.f32 %v335, %v1203
        %v1212 = vmul.f32 %v336, %v1203
        %v1213 = vmul.f32 %v337, %v1203
        %v1214 = vmul.f32 %v338, %v1203
        %v1215 = vmul.f32 %v339, %v1203
        %v1216 = vmul.f32 %v340, %v1203
        %v1217 = vmul.f32 %v341, %v1203
        %v1218 = vmul.f32 %v342, %v1203
        %v1219 = vmul.f32 %v343, %v1203
        %v1220 = vmul.f32 %v344, %v1203
        %v1221 = vmul.f32 %v345, %v1203
        %v1222 = vmul.f32 %v346, %v1203
        %v1223 = vmul.f32 %v347, %v1203
        %v1224 = vmul.f32 %v348, %v1203
        %v1225 = vmul.f32 %v349, %v1203
        %v1226 = vmul.f32 %v350, %v1203
        %v1227 = vmul.f32 %v351, %v1203
        %v1228 = vmul.f32 %v352, %v1203
        %v1229 = vmul.f32 %v353, %v1203
        %v1230 = vmul.f32 %v354, %v1203
        %v1231 = vmul.f32 %v355, %v1203
        %v1232 = vmul.f32 %v356, %v1203
        %v1233 = vmul.f32 %v357, %v1203
        %v1234 = vmul.f32 %v358, %v1203
        %v1235 = vmul.f32 %v359, %v1203
        %v1236 = vmul.f32 %v360, %v1203
        %v1237 = vmul.f32 %v361, %v1203
        %v1238 = vmul.f32 %v362, %v1203
        %v1239 = vmul.f32 %v363, %v1203
        %v1240 = vmul.f32 %v364, %v1203
        %v1241 = vmul.f32 %v365, %v1203
        %v1242 = vmul.f32 %v366, %v1203
        %v1243 = vmul.f32 %v367, %v1203
        %v1244 = vmul.f32 %v368, %v1203
        %v1245 = vmul.f32 %v369, %v1203
        %v1246 = vmul.f32 %v370, %v1203
        %v1247 = vmul.f32 %v371, %v1203
        %v1248 = vmul.f32 %v372, %v1203
        %v1249 = vmul.f32 %v373, %v1203
        %v1250 = vmul.f32 %v374, %v1203
        %v1251 = vmul.f32 %v375, %v1203
        %v1252 = vadd.f32 %v1204, 0.0
        %v1253 = vadd.f32 %v1205, 0.0
        %v1254 = vadd.f32 %v1206, 0.0
        %v1255 = vadd.f32 %v1207, 0.0
        %v1256 = vadd.f32 %v1208, 0.0
        %v1257 = vadd.f32 %v1209, 0.0
        %v1258 = vadd.f32 %v1210, 0.0
        %v1259 = vadd.f32 %v1211, 0.0
        %v1260 = vadd.f32 %v1212, 0.0
        %v1261 = vadd.f32 %v1213, 0.0
        %v1262 = vadd.f32 %v1214, 0.0
        %v1263 = vadd.f32 %v1215, 0.0
        %v1264 = vadd.f32 %v1216, 0.0
        %v1265 = vadd.f32 %v1217, 0.0
        %v1266 = vadd.f32 %v1218, 0.0
        %v1267 = vadd.f32 %v1219, 0.0
        %v1268 = vadd.f32 %v1220, 0.0
        %v1269 = vadd.f32 %v1221, 0.0
        %v1270 = vadd.f32 %v1222, 0.0
        %v1271 = vadd.f32 %v1223, 0.0
        %v1272 = vadd.f32 %v1224, 0.0
        %v1273 = vadd.f32 %v1225, 0.0
        %v1274 = vadd.f32 %v1226, 0.0
        %v1275 = vadd.f32 %v1227, 0.0
        %v1276 = vadd.f32 %v1228, 0.0
        %v1277 = vadd.f32 %v1229, 0.0
        %v1278 = vadd.f32 %v1230, 0.0
        %v1279 = vadd.f32 %v1231, 0.0
        %v1280 = vadd.f32 %v1232, 0.0
        %v1281 = vadd.f32 %v1233, 0.0
        %v1282 = vadd.f32 %v1234, 0.0
        %v1283 = vadd.f32 %v1235, 0.0
        %v1284 = vadd.f32 %v1236, 0.0
        %v1285 = vadd.f32 %v1237, 0.0
        %v1286 = vadd.f32 %v1238, 0.0
        %v1287 = vadd.f32 %v1239, 0.0
        %v1288 = vadd.f32 %v1240, 0.0
        %v1289 = vadd.f32 %v1241, 0.0
        %v1290 = vadd.f32 %v1242, 0.0
        %v1291 = vadd.f32 %v1243, 0.0
        %v1292 = vadd.f32 %v1244, 0.0
        %v1293 = vadd.f32 %v1245, 0.0
        %v1294 = vadd.f32 %v1246, 0.0
        %v1295 = vadd.f32 %v1247, 0.0
        %v1296 = vadd.f32 %v1248, 0.0
        %v1297 = vadd.f32 %v1249, 0.0
        %v1298 = vadd.f32 %v1250, 0.0
        %v1299 = vadd.f32 %v1251, 0.0
        %v1300 = vperm.slane %v278, 5
        %v1301 = vmul.f32 %v490, %v1300
        %v1302 = vmul.f32 %v491, %v1300
        %v1303 = vmul.f32 %v492, %v1300
        %v1304 = vmul.f32 %v493, %v1300
        %v1305 = vmul.f32 %v494, %v1300
        %v1306 = vmul.f32 %v495, %v1300
        %v1307 = vmul.f32 %v496, %v1300
        %v1308 = vmul.f32 %v497, %v1300
        %v1309 = vmul.f32 %v498, %v1300
        %v1310 = vmul.f32 %v499, %v1300
        %v1311 = vmul.f32 %v500, %v1300
        %v1312 = vmul.f32 %v501, %v1300
        %v1313 = vmul.f32 %v502, %v1300
        %v1314 = vmul.f32 %v503, %v1300
        %v1315 = vmul.f32 %v504, %v1300
        %v1316 = vmul.f32 %v505, %v1300
        %v1317 = vmul.f32 %v506, %v1300
        %v1318 = vmul.f32 %v507, %v1300
        %v1319 = vmul.f32 %v508, %v1300
        %v1320 = vmul.f32 %v509, %v1300
        %v1321 = vmul.f32 %v510, %v1300
        %v1322 = vmul.f32 %v511, %v1300
        %v1323 = vmul.f32 %v512, %v1300
        %v1324 = vmul.f32 %v513, %v1300
        %v1325 = vmul.f32 %v514, %v1300
        %v1326 = vmul.f32 %v515, %v1300
        %v1327 = vmul.f32 %v516, %v1300
        %v1328 = vmul.f32 %v517, %v1300
        %v1329 = vmul.f32 %v518, %v1300
        %v1330 = vmul.f32 %v519, %v1300
        %v1331 = vmul.f32 %v520, %v1300
        %v1332 = vmul.f32 %v521, %v1300
        %v1333 = vmul.f32 %v522, %v1300
        %v1334 = vmul.f32 %v523, %v1300
        %v1335 = vmul.f32 %v524, %v1300
        %v1336 = vmul.f32 %v525, %v1300
        %v1337 = vmul.f32 %v526, %v1300
        %v1338 = vmul.f32 %v527, %v1300
        %v1339 = vmul.f32 %v528, %v1300
        %v1340 = vmul.f32 %v529, %v1300
        %v1341 = vmul.f32 %v530, %v1300
        %v1342 = vmul.f32 %v531, %v1300
        %v1343 = vmul.f32 %v532, %v1300
        %v1344 = vmul.f32 %v533, %v1300
        %v1345 = vmul.f32 %v534, %v1300
        %v1346 = vmul.f32 %v535, %v1300
        %v1347 = vmul.f32 %v536, %v1300
        %v1348 = vmul.f32 %v537, %v1300
        %v1349 = vadd.f32 %v1252, %v1301
        %v1350 = vadd.f32 %v1253, %v1302
        %v1351 = vadd.f32 %v1254, %v1303
        %v1352 = vadd.f32 %v1255, %v1304
        %v1353 = vadd.f32 %v1256, %v1305
        %v1354 = vadd.f32 %v1257, %v1306
        %v1355 = vadd.f32 %v1258, %v1307
        %v1356 = vadd.f32 %v1259, %v1308
        %v1357 = vadd.f32 %v1260, %v1309
        %v1358 = vadd.f32 %v1261, %v1310
        %v1359 = vadd.f32 %v1262, %v1311
        %v1360 = vadd.f32 %v1263, %v1312
        %v1361 = vadd.f32 %v1264, %v1313
        %v1362 = vadd.f32 %v1265, %v1314
        %v1363 = vadd.f32 %v1266, %v1315
        %v1364 = vadd.f32 %v1267, %v1316
        %v1365 = vadd.f32 %v1268, %v1317
        %v1366 = vadd.f32 %v1269, %v1318
        %v1367 = vadd.f32 %v1270, %v1319
        %v1368 = vadd.f32 %v1271, %v1320
        %v1369 = vadd.f32 %v1272, %v1321
        %v1370 = vadd.f32 %v1273, %v1322
        %v1371 = vadd.f32 %v1274, %v1323
        %v1372 = vadd.f32 %v1275, %v1324
        %v1373 = vadd.f32 %v1276, %v1325
        %v1374 = vadd.f32 %v1277, %v1326
        %v1375 = vadd.f32 %v1278, %v1327
        %v1376 = vadd.f32 %v1279, %v1328
        %v1377 = vadd.f32 %v1280, %v1329
        %v1378 = vadd.f32 %v1281, %v1330
        %v1379 = vadd.f32 %v1282, %v1331
        %v1380 = vadd.f32 %v1283, %v1332
        %v1381 = vadd.f32 %v1284, %v1333
        %v1382 = vadd.f32 %v1285, %v1334
        %v1383 = vadd.f32 %v1286, %v1335
        %v1384 = vadd.f32 %v1287, %v1336
        %v1385 = vadd.f32 %v1288, %v1337
        %v1386 = vadd.f32 %v1289, %v1338
        %v1387 = vadd.f32 %v1290, %v1339
        %v1388 = vadd.f32 %v1291, %v1340
        %v1389 = vadd.f32 %v1292, %v1341
        %v1390 = vadd.f32 %v1293, %v1342
        %v1391 = vadd.f32 %v1294, %v1343
        %v1392 = vadd.f32 %v1295, %v1344
        %v1393 = vadd.f32 %v1296, %v1345
        %v1394 = vadd.f32 %v1297, %v1346
        %v1395 = vadd.f32 %v1298, %v1347
        %v1396 = vadd.f32 %v1299, %v1348
        %v1397 = vperm.slane %v279, 0
        %v1398 = vmul.f32 %v652, %v1397
        %v1399 = vmul.f32 %v653, %v1397
        %v1400 = vmul.f32 %v654, %v1397
        %v1401 = vmul.f32 %v655, %v1397
        %v1402 = vmul.f32 %v656, %v1397
        %v1403 = vmul.f32 %v657, %v1397
        %v1404 = vmul.f32 %v658, %v1397
        %v1405 = vmul.f32 %v659, %v1397
        %v1406 = vmul.f32 %v660, %v1397
        %v1407 = vmul.f32 %v661, %v1397
        %v1408 = vmul.f32 %v662, %v1397
        %v1409 = vmul.f32 %v663, %v1397
        %v1410 = vmul.f32 %v664, %v1397
        %v1411 = vmul.f32 %v665, %v1397
        %v1412 = vmul.f32 %v666, %v1397
        %v1413 = vmul.f32 %v667, %v1397
        %v1414 = vmul.f32 %v668, %v1397
        %v1415 = vmul.f32 %v669, %v1397
        %v1416 = vmul.f32 %v670, %v1397
        %v1417 = vmul.f32 %v671, %v1397
        %v1418 = vmul.f32 %v672, %v1397
        %v1419 = vmul.f32 %v673, %v1397
        %v1420 = vmul.f32 %v674, %v1397
        %v1421 = vmul.f32 %v675, %v1397
        %v1422 = vmul.f32 %v676, %v1397
        %v1423 = vmul.f32 %v677, %v1397
        %v1424 = vmul.f32 %v678, %v1397
        %v1425 = vmul.f32 %v679, %v1397
        %v1426 = vmul.f32 %v680, %v1397
        %v1427 = vmul.f32 %v681, %v1397
        %v1428 = vmul.f32 %v682, %v1397
        %v1429 = vmul.f32 %v683, %v1397
        %v1430 = vmul.f32 %v684, %v1397
        %v1431 = vmul.f32 %v685, %v1397
        %v1432 = vmul.f32 %v686, %v1397
        %v1433 = vmul.f32 %v687, %v1397
        %v1434 = vmul.f32 %v688, %v1397
        %v1435 = vmul.f32 %v689, %v1397
        %v1436 = vmul.f32 %v690, %v1397
        %v1437 = vmul.f32 %v691, %v1397
        %v1438 = vmul.f32 %v692, %v1397
        %v1439 = vmul.f32 %v693, %v1397
        %v1440 = vmul.f32 %v694, %v1397
        %v1441 = vmul.f32 %v695, %v1397
        %v1442 = vmul.f32 %v696, %v1397
        %v1443 = vmul.f32 %v697, %v1397
        %v1444 = vmul.f32 %v698, %v1397
        %v1445 = vmul.f32 %v699, %v1397
        %v1446 = vadd.f32 %v1349, %v1398
        %v1447 = vadd.f32 %v1350, %v1399
        %v1448 = vadd.f32 %v1351, %v1400
        %v1449 = vadd.f32 %v1352, %v1401
        %v1450 = vadd.f32 %v1353, %v1402
        %v1451 = vadd.f32 %v1354, %v1403
        %v1452 = vadd.f32 %v1355, %v1404
        %v1453 = vadd.f32 %v1356, %v1405
        %v1454 = vadd.f32 %v1357, %v1406
        %v1455 = vadd.f32 %v1358, %v1407
        %v1456 = vadd.f32 %v1359, %v1408
        %v1457 = vadd.f32 %v1360, %v1409
        %v1458 = vadd.f32 %v1361, %v1410
        %v1459 = vadd.f32 %v1362, %v1411
        %v1460 = vadd.f32 %v1363, %v1412
        %v1461 = vadd.f32 %v1364, %v1413
        %v1462 = vadd.f32 %v1365, %v1414
        %v1463 = vadd.f32 %v1366, %v1415
        %v1464 = vadd.f32 %v1367, %v1416
        %v1465 = vadd.f32 %v1368, %v1417
        %v1466 = vadd.f32 %v1369, %v1418
        %v1467 = vadd.f32 %v1370, %v1419
        %v1468 = vadd.f32 %v1371, %v1420
        %v1469 = vadd.f32 %v1372, %v1421
        %v1470 = vadd.f32 %v1373, %v1422
        %v1471 = vadd.f32 %v1374, %v1423
        %v1472 = vadd.f32 %v1375, %v1424
        %v1473 = vadd.f32 %v1376, %v1425
        %v1474 = vadd.f32 %v1377, %v1426
        %v1475 = vadd.f32 %v1378, %v1427
        %v1476 = vadd.f32 %v1379, %v1428
        %v1477 = vadd.f32 %v1380, %v1429
        %v1478 = vadd.f32 %v1381, %v1430
        %v1479 = vadd.f32 %v1382, %v1431
        %v1480 = vadd.f32 %v1383, %v1432
        %v1481 = vadd.f32 %v1384, %v1433
        %v1482 = vadd.f32 %v1385, %v1434
        %v1483 = vadd.f32 %v1386, %v1435
        %v1484 = vadd.f32 %v1387, %v1436
        %v1485 = vadd.f32 %v1388, %v1437
        %v1486 = vadd.f32 %v1389, %v1438
        %v1487 = vadd.f32 %v1390, %v1439
        %v1488 = vadd.f32 %v1391, %v1440
        %v1489 = vadd.f32 %v1392, %v1441
        %v1490 = vadd.f32 %v1393, %v1442
        %v1491 = vadd.f32 %v1394, %v1443
        %v1492 = vadd.f32 %v1395, %v1444
        %v1493 = vadd.f32 %v1396, %v1445
        %v1494 = vrot.slane %v1446, 2
        %v1495 = vrot.slane %v1447, 2
        %v1496 = vrot.slane %v1448, 2
        %v1497 = vrot.slane %v1449, 2
        %v1498 = vrot.slane %v1450, 2
        %v1499 = vrot.slane %v1451, 2
        %v1500 = vrot.slane %v1452, 2
        %v1501 = vrot.slane %v1453, 2
        %v1502 = vrot.slane %v1454, 2
        %v1503 = vrot.slane %v1455, 2
        %v1504 = vrot.slane %v1456, 2
        %v1505 = vrot.slane %v1457, 2
        %v1506 = vrot.slane %v1458, 2
        %v1507 = vrot.slane %v1459, 2
        %v1508 = vrot.slane %v1460, 2
        %v1509 = vrot.slane %v1461, 2
        %v1510 = vrot.slane %v1462, 2
        %v1511 = vrot.slane %v1463, 2
        %v1512 = vrot.slane %v1464, 2
        %v1513 = vrot.slane %v1465, 2
        %v1514 = vrot.slane %v1466, 2
        %v1515 = vrot.slane %v1467, 2
        %v1516 = vrot.slane %v1468, 2
        %v1517 = vrot.slane %v1469, 2
        %v1518 = vrot.slane %v1470, 2
        %v1519 = vrot.slane %v1471, 2
        %v1520 = vrot.slane %v1472, 2
        %v1521 = vrot.slane %v1473, 2
        %v1522 = vrot.slane %v1474, 2
        %v1523 = vrot.slane %v1475, 2
        %v1524 = vrot.slane %v1476, 2
        %v1525 = vrot.slane %v1477, 2
        %v1526 = vrot.slane %v1478, 2
        %v1527 = vrot.slane %v1479, 2
        %v1528 = vrot.slane %v1480, 2
        %v1529 = vrot.slane %v1481, 2
        %v1530 = vrot.slane %v1482, 2
        %v1531 = vrot.slane %v1483, 2
        %v1532 = vrot.slane %v1484, 2
        %v1533 = vrot.slane %v1485, 2
        %v1534 = vrot.slane %v1486, 2
        %v1535 = vrot.slane %v1487, 2
        %v1536 = vrot.slane %v1488, 2
        %v1537 = vrot.slane %v1489, 2
        %v1538 = vrot.slane %v1490, 2
        %v1539 = vrot.slane %v1491, 2
        %v1540 = vrot.slane %v1492, 2
        %v1541 = vrot.slane %v1493, 2
        %vm1542 = vcmp.lt.s32.totalorder %v1137, 6
        %v1543 = vsel %vm1542, %v1540, %v1541
        %v1544 = vsel %vm1542, %v1539, %v1540
        %v1545 = vsel %vm1542, %v1537, %v1538
        %v1546 = vsel %vm1542, %v1536, %v1537
        %v1547 = vsel %vm1542, %v1534, %v1535
        %v1548 = vsel %vm1542, %v1533, %v1534
        %v1549 = vsel %vm1542, %v1531, %v1532
        %v1550 = vsel %vm1542, %v1530, %v1531
        %v1551 = vsel %vm1542, %v1528, %v1529
        %v1552 = vsel %vm1542, %v1527, %v1528
        %v1553 = vsel %vm1542, %v1525, %v1526
        %v1554 = vsel %vm1542, %v1524, %v1525
        %v1555 = vsel %vm1542, %v1522, %v1523
        %v1556 = vsel %vm1542, %v1521, %v1522
        %v1557 = vsel %vm1542, %v1519, %v1520
        %v1558 = vsel %vm1542, %v1518, %v1519
        %v1559 = vsel %vm1542, %v1516, %v1517
        %v1560 = vsel %vm1542, %v1515, %v1516
        %v1561 = vsel %vm1542, %v1513, %v1514
        %v1562 = vsel %vm1542, %v1512, %v1513
        %v1563 = vsel %vm1542, %v1510, %v1511
        %v1564 = vsel %vm1542, %v1509, %v1510
        %v1565 = vsel %vm1542, %v1507, %v1508
        %v1566 = vsel %vm1542, %v1506, %v1507
        %v1567 = vsel %vm1542, %v1504, %v1505
        %v1568 = vsel %vm1542, %v1503, %v1504
        %v1569 = vsel %vm1542, %v1501, %v1502
        %v1570 = vsel %vm1542, %v1500, %v1501
        %v1571 = vsel %vm1542, %v1498, %v1499
        %v1572 = vsel %vm1542, %v1497, %v1498
        %v1573 = vsel %vm1542, %v1495, %v1496
        %v1574 = vsel %vm1542, %v1494, %v1495
        %v1575 = vadd.f32 %v1171, %v1574
        %v1576 = vadd.f32 %v1172, %v1573
        %v1577 = vadd.f32 %v1173, %v1572
        %v1578 = vadd.f32 %v1174, %v1571
        %v1579 = vadd.f32 %v1175, %v1570
        %v1580 = vadd.f32 %v1176, %v1569
        %v1581 = vadd.f32 %v1177, %v1568
        %v1582 = vadd.f32 %v1178, %v1567
        %v1583 = vadd.f32 %v1179, %v1566
        %v1584 = vadd.f32 %v1180, %v1565
        %v1585 = vadd.f32 %v1181, %v1564
        %v1586 = vadd.f32 %v1182, %v1563
        %v1587 = vadd.f32 %v1183, %v1562
        %v1588 = vadd.f32 %v1184, %v1561
        %v1589 = vadd.f32 %v1185, %v1560
        %v1590 = vadd.f32 %v1186, %v1559
        %v1591 = vadd.f32 %v1187, %v1558
        %v1592 = vadd.f32 %v1188, %v1557
        %v1593 = vadd.f32 %v1189, %v1556
        %v1594 = vadd.f32 %v1190, %v1555
        %v1595 = vadd.f32 %v1191, %v1554
        %v1596 = vadd.f32 %v1192, %v1553
        %v1597 = vadd.f32 %v1193, %v1552
        %v1598 = vadd.f32 %v1194, %v1551
        %v1599 = vadd.f32 %v1195, %v1550
        %v1600 = vadd.f32 %v1196, %v1549
        %v1601 = vadd.f32 %v1197, %v1548
        %v1602 = vadd.f32 %v1198, %v1547
        %v1603 = vadd.f32 %v1199, %v1546
        %v1604 = vadd.f32 %v1200, %v1545
        %v1605 = vadd.f32 %v1201, %v1544
        %v1606 = vadd.f32 %v1202, %v1543
        %v1607 = vld [vmem:[%s2] sm:$0x1]
        %v1609 = vperm.slane %v1607, 0
        %v1611 = vadd.f32 %v1575, %v1609
        %v1612 = vadd.f32 %v1576, %v1609
        %v1613 = vadd.f32 %v1577, %v1609
        %v1614 = vadd.f32 %v1578, %v1609
        %v1615 = vadd.f32 %v1579, %v1609
        %v1616 = vadd.f32 %v1580, %v1609
        %v1617 = vadd.f32 %v1581, %v1609
        %v1618 = vadd.f32 %v1582, %v1609
        %v1619 = vadd.f32 %v1583, %v1609
        %v1620 = vadd.f32 %v1584, %v1609
        %v1621 = vadd.f32 %v1585, %v1609
        %v1622 = vadd.f32 %v1586, %v1609
        %v1623 = vadd.f32 %v1587, %v1609
        %v1624 = vadd.f32 %v1588, %v1609
        %v1625 = vadd.f32 %v1589, %v1609
        %v1626 = vadd.f32 %v1590, %v1609
        %v1627 = vadd.f32 %v1591, %v1609
        %v1628 = vadd.f32 %v1592, %v1609
        %v1629 = vadd.f32 %v1593, %v1609
        %v1630 = vadd.f32 %v1594, %v1609
        %v1631 = vadd.f32 %v1595, %v1609
        %v1632 = vadd.f32 %v1596, %v1609
        %v1633 = vadd.f32 %v1597, %v1609
        %v1634 = vadd.f32 %v1598, %v1609
        %v1635 = vadd.f32 %v1599, %v1609
        %v1636 = vadd.f32 %v1600, %v1609
        %v1637 = vadd.f32 %v1601, %v1609
        %v1638 = vadd.f32 %v1602, %v1609
        %v1639 = vadd.f32 %v1603, %v1609
        %v1640 = vadd.f32 %v1604, %v1609
        %v1641 = vadd.f32 %v1605, %v1609
        %v1642 = vadd.f32 %v1606, %v1609
        %v1643 = vpack.c.bf16 %v1612, %v1611
        %v1644 = vpack.c.bf16 %v1614, %v1613
        %v1645 = vpack.c.bf16 %v1616, %v1615
        %v1646 = vpack.c.bf16 %v1618, %v1617
        %v1647 = vpack.c.bf16 %v1620, %v1619
        %v1648 = vpack.c.bf16 %v1622, %v1621
        %v1649 = vpack.c.bf16 %v1624, %v1623
        %v1650 = vpack.c.bf16 %v1626, %v1625
        %v1651 = vpack.c.bf16 %v1628, %v1627
        %v1652 = vpack.c.bf16 %v1630, %v1629
        %v1653 = vpack.c.bf16 %v1632, %v1631
        %v1654 = vpack.c.bf16 %v1634, %v1633
        %v1655 = vpack.c.bf16 %v1636, %v1635
        %v1656 = vpack.c.bf16 %v1638, %v1637
        %v1657 = vpack.c.bf16 %v1640, %v1639
        %v1658 = vpack.c.bf16 %v1642, %v1641
        %v1659 = vld [vmem:[#allocation7] sm:$0xf]
        %v1660 = vld [vmem:[#allocation7 + $0x4] sm:$0xf]
        %v1661 = vld [vmem:[#allocation7 + $0x8] sm:$0xf]
        %v1662 = vld [vmem:[#allocation7 + $0xc] sm:$0xf]
        %v1663 = vld [vmem:[#allocation7 + $0x10] sm:$0xf]
        %v1664 = vld [vmem:[#allocation7 + $0x14] sm:$0xf]
        %v1665 = vld [vmem:[#allocation7 + $0x18] sm:$0xf]
        %v1666 = vld [vmem:[#allocation7 + $0x1c] sm:$0xf]
        %v1667 = vld [vmem:[#allocation7 + $0x20] sm:$0xf]
        %v1668 = vld [vmem:[#allocation7 + $0x24] sm:$0xf]
        %v1669 = vld [vmem:[#allocation7 + $0x28] sm:$0xf]
        %v1670 = vld [vmem:[#allocation7 + $0x2c] sm:$0xf]
        %v1671 = vld [vmem:[#allocation7 + $0x30] sm:$0xf]
        %v1672 = vld [vmem:[#allocation7 + $0x34] sm:$0xf]
        %v1673 = vld [vmem:[#allocation7 + $0x38] sm:$0xf]
        %v1674 = vld [vmem:[#allocation7 + $0x3c] sm:$0xf]
        %v1675 = vld [vmem:[%s4] sm:$0x1]
        %v1677 = vperm.slane %v1675, 0
        %v1695 = vunpack.c.l.b16 %v1659
        %v1696 = vunpack.c.l.b16 %v1660
        %v1697 = vunpack.c.l.b16 %v1661
        %v1698 = vunpack.c.l.b16 %v1662
        %v1699 = vunpack.c.l.b16 %v1663
        %v1700 = vunpack.c.l.b16 %v1664
        %v1701 = vunpack.c.l.b16 %v1665
        %v1702 = vunpack.c.l.b16 %v1666
        %v1703 = vunpack.c.l.b16 %v1667
        %v1704 = vunpack.c.l.b16 %v1668
        %v1705 = vunpack.c.l.b16 %v1669
        %v1706 = vunpack.c.l.b16 %v1670
        %v1707 = vunpack.c.l.b16 %v1671
        %v1708 = vunpack.c.l.b16 %v1672
        %v1709 = vunpack.c.l.b16 %v1673
        %v1710 = vunpack.c.l.b16 %v1674
        %v1711 = vpack.c.b16 %v1696, %v1695
        %v1712 = vpack.c.b16 %v1698, %v1697
        %v1713 = vpack.c.b16 %v1700, %v1699
        %v1714 = vpack.c.b16 %v1702, %v1701
        %v1715 = vpack.c.b16 %v1704, %v1703
        %v1716 = vpack.c.b16 %v1706, %v1705
        %v1717 = vpack.c.b16 %v1708, %v1707
        %v1718 = vpack.c.b16 %v1710, %v1709
        %1727 = vmatpush.bf16.msra.mxu0 %v1718
        %1728 = vmatpush.bf16.msra.mxu0 %v1717
        %1729 = vmatpush.bf16.msra.mxu0 %v1716
        %1730 = vmatpush.bf16.msra.mxu0 %v1715
        %1731 = vmatpush.bf16.msra.mxu0 %v1714
        %1732 = vmatpush.bf16.msra.mxu0 %v1713
        %1733 = vmatpush.bf16.msra.mxu0 %v1712
        %1734 = vmatpush.bf16.msra.mxu0 %v1711
        %1735 = vmatmul.bf16.gmra.mxu0 %v1643
        %v1736 = vpop.f32.mrf.mxu0
        %v1737 = vadd.f32 %v1677, %v1736
        %v1738 = vpop.f32.mrf.mxu0
        %v1739 = vadd.f32 %v1677, %v1738
        %1740 = vmatmul.bf16.gmra.mxu0 %v1644
        %v1741 = vpop.f32.mrf.mxu0
        %v1742 = vadd.f32 %v1677, %v1741
        %v1743 = vpop.f32.mrf.mxu0
        %v1744 = vadd.f32 %v1677, %v1743
        %1745 = vmatmul.bf16.gmra.mxu0 %v1645
        %v1746 = vpop.f32.mrf.mxu0
        %v1747 = vadd.f32 %v1677, %v1746
        %v1748 = vpop.f32.mrf.mxu0
        %v1749 = vadd.f32 %v1677, %v1748
        %1750 = vmatmul.bf16.gmra.mxu0 %v1646
        %v1751 = vpop.f32.mrf.mxu0
        %v1752 = vadd.f32 %v1677, %v1751
        %v1753 = vpop.f32.mrf.mxu0
        %v1754 = vadd.f32 %v1677, %v1753
        %1755 = vmatmul.bf16.gmra.mxu0 %v1647
        %v1756 = vpop.f32.mrf.mxu0
        %v1757 = vadd.f32 %v1677, %v1756
        %v1758 = vpop.f32.mrf.mxu0
        %v1759 = vadd.f32 %v1677, %v1758
        %1760 = vmatmul.bf16.gmra.mxu0 %v1648
        %v1761 = vpop.f32.mrf.mxu0
        %v1762 = vadd.f32 %v1677, %v1761
        %v1763 = vpop.f32.mrf.mxu0
        %v1764 = vadd.f32 %v1677, %v1763
        %1765 = vmatmul.bf16.gmra.mxu0 %v1649
        %v1766 = vpop.f32.mrf.mxu0
        %v1767 = vadd.f32 %v1677, %v1766
        %v1768 = vpop.f32.mrf.mxu0
        %v1769 = vadd.f32 %v1677, %v1768
        %1770 = vmatmul.bf16.gmra.mxu0 %v1650
        %v1771 = vpop.f32.mrf.mxu0
        %v1772 = vadd.f32 %v1677, %v1771
        %v1773 = vpop.f32.mrf.mxu0
        %v1774 = vadd.f32 %v1677, %v1773
        %1775 = vmatmul.bf16.gmra.mxu0 %v1651
        %v1776 = vpop.f32.mrf.mxu0
        %v1777 = vadd.f32 %v1677, %v1776
        %v1778 = vpop.f32.mrf.mxu0
        %v1779 = vadd.f32 %v1677, %v1778
        %1780 = vmatmul.bf16.gmra.mxu0 %v1652
        %v1781 = vpop.f32.mrf.mxu0
        %v1782 = vadd.f32 %v1677, %v1781
        %v1783 = vpop.f32.mrf.mxu0
        %v1784 = vadd.f32 %v1677, %v1783
        %1785 = vmatmul.bf16.gmra.mxu0 %v1653
        %v1786 = vpop.f32.mrf.mxu0
        %v1787 = vadd.f32 %v1677, %v1786
        %v1788 = vpop.f32.mrf.mxu0
        %v1789 = vadd.f32 %v1677, %v1788
        %1790 = vmatmul.bf16.gmra.mxu0 %v1654
        %v1791 = vpop.f32.mrf.mxu0
        %v1792 = vadd.f32 %v1677, %v1791
        %v1793 = vpop.f32.mrf.mxu0
        %v1794 = vadd.f32 %v1677, %v1793
        %1795 = vmatmul.bf16.gmra.mxu0 %v1655
        %v1796 = vpop.f32.mrf.mxu0
        %v1797 = vadd.f32 %v1677, %v1796
        %v1798 = vpop.f32.mrf.mxu0
        %v1799 = vadd.f32 %v1677, %v1798
        %1800 = vmatmul.bf16.gmra.mxu0 %v1656
        %v1801 = vpop.f32.mrf.mxu0
        %v1802 = vadd.f32 %v1677, %v1801
        %v1803 = vpop.f32.mrf.mxu0
        %v1804 = vadd.f32 %v1677, %v1803
        %1805 = vmatmul.bf16.gmra.mxu0 %v1657
        %v1806 = vpop.f32.mrf.mxu0
        %v1807 = vadd.f32 %v1677, %v1806
        %v1808 = vpop.f32.mrf.mxu0
        %v1809 = vadd.f32 %v1677, %v1808
        %1810 = vmatmul.bf16.gmra.mxu0 %v1658
        %v1811 = vpop.f32.mrf.mxu0
        %v1812 = vadd.f32 %v1677, %v1811
        %v1813 = vpop.f32.mrf.mxu0
        %v1814 = vadd.f32 %v1677, %v1813
        %1815 = vdwg.mxu0
        %1816 = vst [vmem:[%s277] sm:$0xff] %v1737
        %1817 = vst [vmem:[%s277 + $0x8] sm:$0xff] %v1739
        %1818 = vst [vmem:[%s277 + $0x10] sm:$0xff] %v1742
        %1819 = vst [vmem:[%s277 + $0x18] sm:$0xff] %v1744
        %1820 = vst [vmem:[%s277 + $0x20] sm:$0xff] %v1747
        %1821 = vst [vmem:[%s277 + $0x28] sm:$0xff] %v1749
        %1822 = vst [vmem:[%s277 + $0x30] sm:$0xff] %v1752
        %1823 = vst [vmem:[%s277 + $0x38] sm:$0xff] %v1754
        %1824 = vst [vmem:[%s277 + $0x40] sm:$0xff] %v1757
        %1825 = vst [vmem:[%s277 + $0x48] sm:$0xff] %v1759
        %1826 = vst [vmem:[%s277 + $0x50] sm:$0xff] %v1762
        %1827 = vst [vmem:[%s277 + $0x58] sm:$0xff] %v1764
        %1828 = vst [vmem:[%s277 + $0x60] sm:$0xff] %v1767
        %1829 = vst [vmem:[%s277 + $0x68] sm:$0xff] %v1769
        %1830 = vst [vmem:[%s277 + $0x70] sm:$0xff] %v1772
        %1831 = vst [vmem:[%s277 + $0x78] sm:$0xff] %v1774
        %1832 = vst [vmem:[%s277 + $0x80] sm:$0xff] %v1777
        %1833 = vst [vmem:[%s277 + $0x88] sm:$0xff] %v1779
        %1834 = vst [vmem:[%s277 + $0x90] sm:$0xff] %v1782
        %1835 = vst [vmem:[%s277 + $0x98] sm:$0xff] %v1784
        %1836 = vst [vmem:[%s277 + $0xa0] sm:$0xff] %v1787
        %1837 = vst [vmem:[%s277 + $0xa8] sm:$0xff] %v1789
        %1838 = vst [vmem:[%s277 + $0xb0] sm:$0xff] %v1792
        %1839 = vst [vmem:[%s277 + $0xb8] sm:$0xff] %v1794
        %1840 = vst [vmem:[%s277 + $0xc0] sm:$0xff] %v1797
        %1841 = vst [vmem:[%s277 + $0xc8] sm:$0xff] %v1799
        %1842 = vst [vmem:[%s277 + $0xd0] sm:$0xff] %v1802
        %1843 = vst [vmem:[%s277 + $0xd8] sm:$0xff] %v1804
        %1844 = vst [vmem:[%s277 + $0xe0] sm:$0xff] %v1807
        %1845 = vst [vmem:[%s277 + $0xe8] sm:$0xff] %v1809
        %1846 = vst [vmem:[%s277 + $0xf0] sm:$0xff] %v1812
        %1847 = vst [vmem:[%s277 + $0xf8] sm:$0xff] %v1814
        %s1848 = sand.u32 %s141, 1
        %s1849 = scalar_lea.sflag [#allocation4], %s1848
        %s1850 = sand.u32 %s141, 1
        %s1851 = smul.addr %s1850, 256
        %s1852 = scalar_lea.vmem [#allocation8], %s1851
        // Predicated region
        $region53: #{tpu_custom_call.1} parent=39 // pred_check
          %p1853 = pneg %p151
        $region54: #{tpu_custom_call.1} parent=39 // pred_check_branch
          %1855 = sbr.rel (%p1853) target = $region56
        $region55: #{tpu_custom_call.1} parent=39 // pred_region
          %1857 = vsyncadd %s1849, 0
          %s1858 = smul.addr %s23, 32
          %s1859 = smul.addr %s1858, 8
          %s1860 = scalar_lea.hbm %s5, %s1859
          %s1861 = sshll.u32 %s1852, 4
          %s1862 = int_to_ptr.vmem [resolvable:$true] %s1861
          %s1863 = sshll.u32 %s1860, 4
          %s1864 = int_to_ptr.hbm [resolvable:$true] %s1863
          %1869 = dma.vmem_to_hbm [thread:$0]  %s1862, 4096, %s1864, %s1849, 128, 128, 8
        $region56: #{tpu_custom_call.1} parent=39 // pred_fallthru
          _
      $region40: #{tpu_custom_call.1} parent=5 // pred_fallthru
        _
      %p1870 = scmp.le.s32.totalorder 2, %s18
      // Predicated region
      $region57: #{tpu_custom_call.1} parent=5 // pred_check
        %p1871 = pneg %p1870
      $region58: #{tpu_custom_call.1} parent=5 // pred_check_branch
        %1873 = sbr.rel (%p1871) target = $region60
      $region59: #{tpu_custom_call.1} parent=5 // pred_region
        %s1874 = ssub.s32 %s18, 2
        // Predicated region
        $region61: #{tpu_custom_call.1} parent=59 // pred_check
          %p1875 = pneg %p157
        $region62: #{tpu_custom_call.1} parent=59 // pred_check_branch
          %1877 = sbr.rel (%p1875) target = $region64
        $region63: #{tpu_custom_call.1} parent=59 // pred_region
          %s1878 = sand.u32 %s142, 1
          %s1879 = scalar_lea.sflag [#allocation4], %s1878
          %s1880 = sand.u32 %s142, 1
          %s1881 = smul.addr %s1880, 256
          %s1882 = scalar_lea.vmem [#allocation8], %s1881
          %1884 = dma.done %s1879, 4096
        $region64: #{tpu_custom_call.1} parent=59 // pred_fallthru
          _
      $region60: #{tpu_custom_call.1} parent=5 // pred_fallthru
        _
    $region6: #{tpu_custom_call.1} parent=1 // loop_footer
      %s22 = sadd.s32 1, %s18
    $region7: #{tpu_custom_call.1} parent=1 // loop_footer_branch
      %17 = sbr.rel target = $region3
    $region8: #{tpu_custom_call.1} parent=1 // loop_exit
      _
    %1885 = vsyncpa [#allocation3], 1
    %s1886 = scalar_lea.sflag [#allocation3], 1
    %1887 = vsyncpa %s1886, 1
    %1888 = vsyncpa [#allocation6], 1
    %1889 = vsyncpa [#allocation4], 1
    %s1890 = scalar_lea.sflag [#allocation4], 1
    %1891 = vsyncpa %s1890, 1

</llo_original>
